<compile_context>
chip_gen: v5e
topology: v5e:2x2
jax: 0.10.0
libtpu: 0.0.40
codegen_flags: <defaults>
</compile_context>

<pallas_src>
import functools
import math

import jax
import jax.numpy as jnp
from jax.experimental import pallas as pl
from jax.experimental.pallas import tpu as pltpu


# ----------------------------------------------------------------------------
# Pallas kernel: one encoder layer for one (batch, q-tile) grid step.
# ----------------------------------------------------------------------------
def _encoder_layer_kernel(xq_ref, xkv_ref,
                          wq_ref, wk_ref, wv_ref, wo_ref,
                          w1_ref, b1_ref, w2_ref, b2_ref,
                          ln1g_ref, ln1b_ref, ln2g_ref, ln2b_ref,
                          out_ref, attn_ref,
                          kh_ref, vh_ref, *, n_heads):
    xq = xq_ref[0]                          # [tq, D] bf16 (query rows)
    tq, D = xq.shape
    L = xkv_ref.shape[1]
    dh = D // n_heads
    scale = 1.0 / math.sqrt(dh)

    # K/V of the full sequence are shared by every query tile of this batch
    # element: project them once per batch (qi == 0) into persistent VMEM
    # scratch, head-split and bf16-cast for the attention matmuls.
    @pl.when(pl.program_id(1) == 0)
    def _():
        xkv = xkv_ref[0]                                          # [L, D] bf16
        k = jnp.dot(xkv, wk_ref[...], preferred_element_type=jnp.float32)
        v = jnp.dot(xkv, wv_ref[...], preferred_element_type=jnp.float32)
        kh_ref[...] = jnp.transpose(
            k.reshape(L, n_heads, dh), (1, 0, 2)).astype(jnp.bfloat16)
        vh_ref[...] = jnp.transpose(
            v.reshape(L, n_heads, dh), (1, 0, 2)).astype(jnp.bfloat16)

    # Q projection (full-width matmul on the MXU, bf16 in / f32 accumulate).
    q = jnp.dot(xq, wq_ref[...], preferred_element_type=jnp.float32) * scale
    qh = jnp.transpose(q.reshape(tq, n_heads, dh), (1, 0, 2)).astype(jnp.bfloat16)

    kh = kh_ref[...]                                              # [H, L, dh]
    vh = vh_ref[...]                                              # [H, L, dh]

    # Batched attention over heads; softmax math stays in f32.
    s = jnp.einsum('hqd,hkd->hqk', qh, kh,
                   preferred_element_type=jnp.float32)            # [H, tq, L]
    s = s - jnp.max(s, axis=-1, keepdims=True)
    e = jnp.exp(s)
    a = e * pl.reciprocal(jnp.sum(e, axis=-1, keepdims=True), approx=True)

    attn_ref[0] = a.astype(attn_ref.dtype)                        # bf16 writeback

    ctx = jnp.einsum('hqk,hkd->hqd', a.astype(jnp.bfloat16), vh,
                     preferred_element_type=jnp.float32)          # [H, tq, dh]
    ctx = jnp.transpose(ctx, (1, 0, 2)).reshape(tq, D)            # merge heads once
    new_x = jnp.dot(ctx.astype(jnp.bfloat16), wo_ref[...],
                    preferred_element_type=jnp.float32)           # [tq, D]

    # Residual + LayerNorm 1 (f32).
    x1 = xq.astype(jnp.float32) + new_x
    mu1 = jnp.mean(x1, axis=-1, keepdims=True)
    var1 = jnp.mean((x1 - mu1) ** 2, axis=-1, keepdims=True)
    xn = (x1 - mu1) * jax.lax.rsqrt(var1 + 1e-5) * ln1g_ref[...] + ln1b_ref[...]

    # FFN (Conv1d kernel_size=1 equivalents) with ReLU; bf16 matmuls, f32 math.
    y = jnp.dot(xn.astype(jnp.bfloat16), w1_ref[...],
                preferred_element_type=jnp.float32) + b1_ref[...]
    y = jnp.maximum(y, 0.0)
    y = jnp.dot(y.astype(jnp.bfloat16), w2_ref[...],
                preferred_element_type=jnp.float32) + b2_ref[...]

    # Residual + LayerNorm 2 (f32).
    x2 = xn + y
    mu2 = jnp.mean(x2, axis=-1, keepdims=True)
    var2 = jnp.mean((x2 - mu2) ** 2, axis=-1, keepdims=True)
    out = (x2 - mu2) * jax.lax.rsqrt(var2 + 1e-5) * ln2g_ref[...] + ln2b_ref[...]

    out_ref[0] = out.astype(out_ref.dtype)


def _replicated(shape):
    n = len(shape)
    return pl.BlockSpec(shape, lambda b, qi: (0,) * n)


def encoder_layer(x, params, *, n_heads, q_tile=256):
    """Run one encoder layer via pallas_call.  x: [B, L, D] float32."""
    B, L, D = x.shape
    d_ff = params["w1"].shape[1]
    dh = D // n_heads

    # Query-dimension tiling (full-row softmax needs all of K/V, so only Q tiles).
    tq = L if (L <= q_tile or L % q_tile != 0) else q_tile
    nq = L // tq

    bf = lambda a: a.astype(jnp.bfloat16)
    x_bf16 = bf(x)

    # Explicit VMEM budget: double-buffered blocks + resident weights + K/V
    # scratch, with headroom, clamped to the v7x physical ceiling (64 MiB).
    block_bytes = 2 * (tq * D * 2 + L * D * 2            # x_q, x_kv (bf16)
                       + tq * D * 4                       # out block (f32)
                       + n_heads * tq * L * 2)            # attn block (bf16)
    weight_bytes = 2 * ((4 * D * D + 2 * D * d_ff) * 2 + (2 * d_ff + 6 * D) * 4)
    scratch_bytes = 2 * L * D * 2                         # kh + vh (bf16)
    vmem_budget = int(1.5 * (block_bytes + weight_bytes + scratch_bytes)) + (4 << 20)
    vmem_budget = max(16 << 20, min(vmem_budget, 64 << 20))

    kernel = functools.partial(_encoder_layer_kernel, n_heads=n_heads)

    out_x, out_attn = pl.pallas_call(
        kernel,
        out_shape=(
            jax.ShapeDtypeStruct((B, L, D), jnp.float32),
            jax.ShapeDtypeStruct((B, n_heads, L, L), jnp.bfloat16),
        ),
        grid=(B, nq),
        in_specs=[
            pl.BlockSpec((1, tq, D), lambda b, qi: (b, qi, 0)),   # x (query rows)
            pl.BlockSpec((1, L, D), lambda b, qi: (b, 0, 0)),     # x (full, for K/V)
            _replicated((D, D)),                                   # wq
            _replicated((D, D)),                                   # wk
            _replicated((D, D)),                                   # wv
            _replicated((D, D)),                                   # wo
            _replicated((D, d_ff)),                                # w1
            _replicated((1, d_ff)),                                # b1
            _replicated((d_ff, D)),                                # w2
            _replicated((1, D)),                                   # b2
            _replicated((1, D)),                                   # ln1 gamma
            _replicated((1, D)),                                   # ln1 beta
            _replicated((1, D)),                                   # ln2 gamma
            _replicated((1, D)),                                   # ln2 beta
        ],
        out_specs=(
            pl.BlockSpec((1, tq, D), lambda b, qi: (b, qi, 0)),
            pl.BlockSpec((1, n_heads, tq, L), lambda b, qi: (b, 0, qi, 0)),
        ),
        scratch_shapes=[
            pltpu.VMEM((n_heads, L, dh), jnp.bfloat16),   # kh cache (per batch)
            pltpu.VMEM((n_heads, L, dh), jnp.bfloat16),   # vh cache (per batch)
        ],
        compiler_params=pltpu.CompilerParams(
            # q-tile axis carries the K/V scratch across iterations -> arbitrary.
            dimension_semantics=("parallel", "arbitrary"),
            vmem_limit_bytes=vmem_budget),
    )(x_bf16, x_bf16,
      bf(params["wq"]), bf(params["wk"]), bf(params["wv"]), bf(params["wo"]),
      bf(params["w1"]), params["b1"], bf(params["w2"]), params["b2"],
      params["ln1_g"], params["ln1_b"], params["ln2_g"], params["ln2_b"])
    return out_x, out_attn


# ----------------------------------------------------------------------------
# EncoderStack forward: slice -> encoder -> concat along sequence axis.
# ----------------------------------------------------------------------------
def encoder_stack_forward(x, encoders_params, inp_lens, *, n_heads):
    x_stack = []
    attns = []
    for i_len, params in zip(inp_lens, encoders_params):
        inp_len = x.shape[1] // (2 ** i_len)
        x_slice = x[:, -inp_len:, :]
        x_s, attn = encoder_layer(x_slice, params, n_heads=n_heads)
        x_stack.append(x_s)
        attns.append(attn)
    x_stack = jnp.concatenate(x_stack, axis=-2)
    return x_stack, attns


# ----------------------------------------------------------------------------
# Deterministic parameter construction (synthetic, no checkpoints).
# ----------------------------------------------------------------------------
def make_encoder_params(key, d_model, d_ff):
    ks = jax.random.split(key, 6)
    std = 0.02
    return {
        "wq": std * jax.random.normal(ks[0], (d_model, d_model), jnp.float32),
        "wk": std * jax.random.normal(ks[1], (d_model, d_model), jnp.float32),
        "wv": std * jax.random.normal(ks[2], (d_model, d_model), jnp.float32),
        "wo": std * jax.random.normal(ks[3], (d_model, d_model), jnp.float32),
        "w1": std * jax.random.normal(ks[4], (d_model, d_ff), jnp.float32),
        "b1": jnp.zeros((1, d_ff), jnp.float32),
        "w2": std * jax.random.normal(ks[5], (d_ff, d_model), jnp.float32),
        "b2": jnp.zeros((1, d_model), jnp.float32),
        "ln1_g": jnp.ones((1, d_model), jnp.float32),
        "ln1_b": jnp.zeros((1, d_model), jnp.float32),
        "ln2_g": jnp.ones((1, d_model), jnp.float32),
        "ln2_b": jnp.zeros((1, d_model), jnp.float32),
    }


if __name__ == "__main__":
    # Small shapes: batch=2, seq=16, d_model=32, heads=2, d_ff=64
    # TODO(synk): production Informer dims (D=512, d_ff=2048, L>=96) fill vregs;
    # these test dims are lane-padded (D < 128) and far below the MXU roofline.
    B, L, D, H, D_FF = 2, 16, 32, 2, 64
    inp_lens = [0, 1]  # two stacked encoders -> slices of length 16 and 8

    key = jax.random.PRNGKey(0)
    k_x, k_e0, k_e1 = jax.random.split(key, 3)
    x = jax.random.normal(k_x, (B, L, D), jnp.float32)

    encoders_params = [
        make_encoder_params(k_e0, D, D_FF),
        make_encoder_params(k_e1, D, D_FF),
    ]

    x_stack, attns = encoder_stack_forward(x, encoders_params, inp_lens, n_heads=H)
    x_stack = jax.block_until_ready(x_stack)
    attns = [jax.block_until_ready(a) for a in attns]

    # Expected: concat of [B,16,D] and [B,8,D] along seq -> [B,24,D]
    assert x_stack.shape == (B, L + L // 2, D), x_stack.shape
    assert attns[0].shape == (B, H, L, L)
    assert attns[1].shape == (B, H, L // 2, L // 2)
    assert bool(jnp.all(jnp.isfinite(x_stack)))
    assert all(bool(jnp.all(jnp.isfinite(a.astype(jnp.float32)))) for a in attns)

    print("KERNEL_OK")
</pallas_src>

<mosaic_0001>
module attributes {stable_mosaic.version = 11 : i64} {
  func.func @_encoder_layer_kernel(%arg0: i32, %arg1: i32, %arg2: memref<1x16x32xbf16, #tpu.memory_space<vmem>>, %arg3: memref<1x16x32xbf16, #tpu.memory_space<vmem>>, %arg4: memref<32x32xbf16, #tpu.memory_space<vmem>>, %arg5: memref<32x32xbf16, #tpu.memory_space<vmem>>, %arg6: memref<32x32xbf16, #tpu.memory_space<vmem>>, %arg7: memref<32x32xbf16, #tpu.memory_space<vmem>>, %arg8: memref<32x64xbf16, #tpu.memory_space<vmem>>, %arg9: memref<1x64xf32, #tpu.memory_space<vmem>>, %arg10: memref<64x32xbf16, #tpu.memory_space<vmem>>, %arg11: memref<1x32xf32, #tpu.memory_space<vmem>>, %arg12: memref<1x32xf32, #tpu.memory_space<vmem>>, %arg13: memref<1x32xf32, #tpu.memory_space<vmem>>, %arg14: memref<1x32xf32, #tpu.memory_space<vmem>>, %arg15: memref<1x32xf32, #tpu.memory_space<vmem>>, %arg16: memref<1x16x32xf32, #tpu.memory_space<vmem>>, %arg17: memref<1x2x16x16xbf16, #tpu.memory_space<vmem>>, %arg18: memref<2x16x16xbf16, #tpu.memory_space<vmem>>, %arg19: memref<2x16x16xbf16, #tpu.memory_space<vmem>>) attributes {dimension_semantics = [#tpu.dimension_semantics<parallel>, #tpu.dimension_semantics<arbitrary>], iteration_bounds = array<i64: 2, 1>, scalar_prefetch = 0 : i64, scratch_operands = 2 : i64, tpu.core_type = #tpu.core_type<tc>, window_params = [{transform_indices = @transform_0, window_bounds = array<i64: 1, 16, 32>}, {transform_indices = @transform_1, window_bounds = array<i64: 1, 16, 32>}, {pipeline_mode = #tpu.pipeline_mode<synchronous>, transform_indices = @transform_2, window_bounds = array<i64: 32, 32>}, {pipeline_mode = #tpu.pipeline_mode<synchronous>, transform_indices = @transform_3, window_bounds = array<i64: 32, 32>}, {pipeline_mode = #tpu.pipeline_mode<synchronous>, transform_indices = @transform_4, window_bounds = array<i64: 32, 32>}, {pipeline_mode = #tpu.pipeline_mode<synchronous>, transform_indices = @transform_5, window_bounds = array<i64: 32, 32>}, {pipeline_mode = #tpu.pipeline_mode<synchronous>, transform_indices = @transform_6, window_bounds = array<i64: 32, 64>}, {pipeline_mode = #tpu.pipeline_mode<synchronous>, transform_indices = @transform_7, window_bounds = array<i64: 1, 64>}, {pipeline_mode = #tpu.pipeline_mode<synchronous>, transform_indices = @transform_8, window_bounds = array<i64: 64, 32>}, {pipeline_mode = #tpu.pipeline_mode<synchronous>, transform_indices = @transform_9, window_bounds = array<i64: 1, 32>}, {pipeline_mode = #tpu.pipeline_mode<synchronous>, transform_indices = @transform_10, window_bounds = array<i64: 1, 32>}, {pipeline_mode = #tpu.pipeline_mode<synchronous>, transform_indices = @transform_11, window_bounds = array<i64: 1, 32>}, {pipeline_mode = #tpu.pipeline_mode<synchronous>, transform_indices = @transform_12, window_bounds = array<i64: 1, 32>}, {pipeline_mode = #tpu.pipeline_mode<synchronous>, transform_indices = @transform_13, window_bounds = array<i64: 1, 32>}, {transform_indices = @transform_14, window_bounds = array<i64: 1, 16, 32>}, {transform_indices = @transform_15, window_bounds = array<i64: 1, 2, 16, 16>}]} {
    %c0 = arith.constant 0 : index
    %c0_0 = arith.constant 0 : index
    %c0_1 = arith.constant 0 : index
    %0 = vector.load %arg2[%c0, %c0_0, %c0_1] : memref<1x16x32xbf16, #tpu.memory_space<vmem>>, vector<1x16x32xbf16>
    %1 = vector.shape_cast %0 : vector<1x16x32xbf16> to vector<16x32xbf16>
    %c0_i32 = arith.constant 0 : i32
    %2 = arith.cmpi eq, %arg1, %c0_i32 : i32
    %3 = arith.extui %2 : i1 to i32
    %c0_i32_2 = arith.constant 0 : i32
    %4 = arith.cmpi ne, %3, %c0_i32_2 : i32
    scf.if %4 {
      %c0_55 = arith.constant 0 : index
      %c0_56 = arith.constant 0 : index
      %c0_57 = arith.constant 0 : index
      %104 = vector.load %arg3[%c0_55, %c0_56, %c0_57] : memref<1x16x32xbf16, #tpu.memory_space<vmem>>, vector<1x16x32xbf16>
      %105 = vector.shape_cast %104 : vector<1x16x32xbf16> to vector<16x32xbf16>
      %c0_58 = arith.constant 0 : index
      %c0_59 = arith.constant 0 : index
      %106 = vector.load %arg5[%c0_58, %c0_59] : memref<32x32xbf16, #tpu.memory_space<vmem>>, vector<32x32xbf16>
      %cst_60 = arith.constant dense<0.000000e+00> : vector<16x32xf32>
      %107 = tpu.matmul %105, %106, %cst_60 {dimension_numbers = #tpu.dot_dimension_numbers<[1], [0], [0], [1], [0, 0, 1, 1], [], []>} : vector<16x32xbf16>, vector<32x32xbf16>, vector<16x32xf32> -> vector<16x32xf32>
      %c0_61 = arith.constant 0 : index
      %c0_62 = arith.constant 0 : index
      %108 = vector.load %arg6[%c0_61, %c0_62] : memref<32x32xbf16, #tpu.memory_space<vmem>>, vector<32x32xbf16>
      %cst_63 = arith.constant dense<0.000000e+00> : vector<16x32xf32>
      %109 = tpu.matmul %105, %108, %cst_63 {dimension_numbers = #tpu.dot_dimension_numbers<[1], [0], [0], [1], [0, 0, 1, 1], [], []>} : vector<16x32xbf16>, vector<32x32xbf16>, vector<16x32xf32> -> vector<16x32xf32>
      %110 = vector.shape_cast %107 : vector<16x32xf32> to vector<16x2x16xf32>
      %111 = tpu.transpose %110, [1, 0, 2] : vector<16x2x16xf32> -> vector<2x16x16xf32>
      %112 = arith.truncf %111 : vector<2x16x16xf32> to vector<2x16x16xbf16>
      %c0_64 = arith.constant 0 : index
      %c0_65 = arith.constant 0 : index
      %c0_66 = arith.constant 0 : index
      %113 = vector.load %arg18[%c0_64, %c0_65, %c0_66] : memref<2x16x16xbf16, #tpu.memory_space<vmem>>, vector<2x16x16xbf16>
      tpu.vector_store %arg18[%c0_64, %c0_65, %c0_66], %112 {strides = array<i32>} : memref<2x16x16xbf16, #tpu.memory_space<vmem>>, vector<2x16x16xbf16>,
      %114 = vector.shape_cast %109 : vector<16x32xf32> to vector<16x2x16xf32>
      %115 = tpu.transpose %114, [1, 0, 2] : vector<16x2x16xf32> -> vector<2x16x16xf32>
      %116 = arith.truncf %115 : vector<2x16x16xf32> to vector<2x16x16xbf16>
      %c0_67 = arith.constant 0 : index
      %c0_68 = arith.constant 0 : index
      %c0_69 = arith.constant 0 : index
      %117 = vector.load %arg19[%c0_67, %c0_68, %c0_69] : memref<2x16x16xbf16, #tpu.memory_space<vmem>>, vector<2x16x16xbf16>
      tpu.vector_store %arg19[%c0_67, %c0_68, %c0_69], %116 {strides = array<i32>} : memref<2x16x16xbf16, #tpu.memory_space<vmem>>, vector<2x16x16xbf16>,
    } else {
    }
    %c0_3 = arith.constant 0 : index
    %c0_4 = arith.constant 0 : index
    %5 = vector.load %arg4[%c0_3, %c0_4] : memref<32x32xbf16, #tpu.memory_space<vmem>>, vector<32x32xbf16>
    %cst = arith.constant dense<0.000000e+00> : vector<16x32xf32>
    %6 = tpu.matmul %1, %5, %cst {dimension_numbers = #tpu.dot_dimension_numbers<[1], [0], [0], [1], [0, 0, 1, 1], [], []>} : vector<16x32xbf16>, vector<32x32xbf16>, vector<16x32xf32> -> vector<16x32xf32>
    %cst_5 = arith.constant 2.500000e-01 : f32
    %7 = vector.broadcast %cst_5 : f32 to vector<16x32xf32>
    %8 = arith.mulf %6, %7 : vector<16x32xf32>
    %9 = vector.shape_cast %8 : vector<16x32xf32> to vector<16x2x16xf32>
    %10 = tpu.transpose %9, [1, 0, 2] : vector<16x2x16xf32> -> vector<2x16x16xf32>
    %11 = arith.truncf %10 : vector<2x16x16xf32> to vector<2x16x16xbf16>
    %c0_6 = arith.constant 0 : index
    %c0_7 = arith.constant 0 : index
    %c0_8 = arith.constant 0 : index
    %12 = vector.load %arg18[%c0_6, %c0_7, %c0_8] : memref<2x16x16xbf16, #tpu.memory_space<vmem>>, vector<2x16x16xbf16>
    %c0_9 = arith.constant 0 : index
    %c0_10 = arith.constant 0 : index
    %c0_11 = arith.constant 0 : index
    %13 = vector.load %arg19[%c0_9, %c0_10, %c0_11] : memref<2x16x16xbf16, #tpu.memory_space<vmem>>, vector<2x16x16xbf16>
    "tpu.trace_start"() <{level = 10 : i32, message = "hqd,hkd->hqk"}> : () -> ()
    %cst_12 = arith.constant dense<0.000000e+00> : vector<2x16x16xf32>
    %14 = tpu.matmul %11, %12, %cst_12 {dimension_numbers = #tpu.dot_dimension_numbers<[2], [2], [1], [1], [0, 0, 0, 1, 1, 1], [0], [0]>} : vector<2x16x16xbf16>, vector<2x16x16xbf16>, vector<2x16x16xf32> -> vector<2x16x16xf32>
    "tpu.trace_stop"() : () -> ()
    %cst_13 = arith.constant dense<0xFF800000> : vector<2x16xf32>
    %15 = vector.multi_reduction <maximumf>, %14, %cst_13 [2] : vector<2x16x16xf32> to vector<2x16xf32>
    %16 = vector.shape_cast %15 : vector<2x16xf32> to vector<2x16x1xf32>
    %17 = vector.broadcast %16 : vector<2x16x1xf32> to vector<2x16x16xf32>
    %18 = arith.subf %14, %17 : vector<2x16x16xf32>
    %19 = math.exp %18 : vector<2x16x16xf32>
    %cst_14 = arith.constant dense<0.000000e+00> : vector<2x16xf32>
    %20 = vector.multi_reduction <add>, %19, %cst_14 [2] : vector<2x16x16xf32> to vector<2x16xf32>
    %21 = vector.shape_cast %20 : vector<2x16xf32> to vector<2x16x1xf32>
    %22 = tpu.reciprocal %21 {approx = true} : vector<2x16x1xf32> -> vector<2x16x1xf32>
    %23 = vector.broadcast %22 : vector<2x16x1xf32> to vector<2x16x16xf32>
    %24 = arith.mulf %19, %23 : vector<2x16x16xf32>
    %25 = arith.truncf %24 : vector<2x16x16xf32> to vector<2x16x16xbf16>
    %c0_15 = arith.constant 0 : index
    %c0_16 = arith.constant 0 : index
    %c0_17 = arith.constant 0 : index
    %c0_18 = arith.constant 0 : index
    %26 = vector.load %arg17[%c0_15, %c0_16, %c0_17, %c0_18] : memref<1x2x16x16xbf16, #tpu.memory_space<vmem>>, vector<1x2x16x16xbf16>
    %27 = vector.shape_cast %26 : vector<1x2x16x16xbf16> to vector<2x16x16xbf16>
    %28 = vector.shape_cast %25 : vector<2x16x16xbf16> to vector<1x2x16x16xbf16>
    tpu.vector_store %arg17[%c0_15, %c0_16, %c0_17, %c0_18], %28 {strides = array<i32>} : memref<1x2x16x16xbf16, #tpu.memory_space<vmem>>, vector<1x2x16x16xbf16>,
    %29 = arith.truncf %24 : vector<2x16x16xf32> to vector<2x16x16xbf16>
    "tpu.trace_start"() <{level = 10 : i32, message = "hqk,hkd->hqd"}> : () -> ()
    %cst_19 = arith.constant dense<0.000000e+00> : vector<2x16x16xf32>
    %30 = tpu.matmul %29, %13, %cst_19 {dimension_numbers = #tpu.dot_dimension_numbers<[2], [1], [1], [2], [0, 0, 0, 1, 1, 2], [0], [0]>} : vector<2x16x16xbf16>, vector<2x16x16xbf16>, vector<2x16x16xf32> -> vector<2x16x16xf32>
    "tpu.trace_stop"() : () -> ()
    %31 = tpu.transpose %30, [1, 0, 2] : vector<2x16x16xf32> -> vector<16x2x16xf32>
    %32 = vector.shape_cast %31 : vector<16x2x16xf32> to vector<16x32xf32>
    %33 = arith.truncf %32 : vector<16x32xf32> to vector<16x32xbf16>
    %c0_20 = arith.constant 0 : index
    %c0_21 = arith.constant 0 : index
    %34 = vector.load %arg7[%c0_20, %c0_21] : memref<32x32xbf16, #tpu.memory_space<vmem>>, vector<32x32xbf16>
    %cst_22 = arith.constant dense<0.000000e+00> : vector<16x32xf32>
    %35 = tpu.matmul %33, %34, %cst_22 {dimension_numbers = #tpu.dot_dimension_numbers<[1], [0], [0], [1], [0, 0, 1, 1], [], []>} : vector<16x32xbf16>, vector<32x32xbf16>, vector<16x32xf32> -> vector<16x32xf32>
    %36 = arith.extf %1 : vector<16x32xbf16> to vector<16x32xf32>
    %37 = arith.addf %36, %35 : vector<16x32xf32>
    %cst_23 = arith.constant dense<0.000000e+00> : vector<16xf32>
    %38 = vector.multi_reduction <add>, %37, %cst_23 [1] : vector<16x32xf32> to vector<16xf32>
    %39 = vector.shape_cast %38 : vector<16xf32> to vector<16x1xf32>
    %cst_24 = arith.constant 3.200000e+01 : f32
    %40 = vector.broadcast %cst_24 : f32 to vector<16x1xf32>
    %41 = arith.divf %39, %40 : vector<16x1xf32>
    %42 = vector.broadcast %41 : vector<16x1xf32> to vector<16x32xf32>
    %43 = arith.subf %37, %42 : vector<16x32xf32>
    %44 = arith.mulf %43, %43 : vector<16x32xf32>
    %cst_25 = arith.constant dense<0.000000e+00> : vector<16xf32>
    %45 = vector.multi_reduction <add>, %44, %cst_25 [1] : vector<16x32xf32> to vector<16xf32>
    %46 = vector.shape_cast %45 : vector<16xf32> to vector<16x1xf32>
    %cst_26 = arith.constant 3.200000e+01 : f32
    %47 = vector.broadcast %cst_26 : f32 to vector<16x1xf32>
    %48 = arith.divf %46, %47 : vector<16x1xf32>
    %49 = vector.broadcast %41 : vector<16x1xf32> to vector<16x32xf32>
    %50 = arith.subf %37, %49 : vector<16x32xf32>
    %cst_27 = arith.constant 9.99999974E-6 : f32
    %51 = vector.broadcast %cst_27 : f32 to vector<16x1xf32>
    %52 = arith.addf %48, %51 : vector<16x1xf32>
    %53 = math.rsqrt %52 : vector<16x1xf32>
    %54 = vector.broadcast %53 : vector<16x1xf32> to vector<16x32xf32>
    %55 = arith.mulf %50, %54 : vector<16x32xf32>
    %c0_28 = arith.constant 0 : index
    %c0_29 = arith.constant 0 : index
    %56 = vector.load %arg12[%c0_28, %c0_29] : memref<1x32xf32, #tpu.memory_space<vmem>>, vector<1x32xf32>
    %57 = vector.broadcast %56 : vector<1x32xf32> to vector<16x32xf32>
    %58 = arith.mulf %55, %57 : vector<16x32xf32>
    %c0_30 = arith.constant 0 : index
    %c0_31 = arith.constant 0 : index
    %59 = vector.load %arg13[%c0_30, %c0_31] : memref<1x32xf32, #tpu.memory_space<vmem>>, vector<1x32xf32>
    %60 = vector.broadcast %59 : vector<1x32xf32> to vector<16x32xf32>
    %61 = arith.addf %58, %60 : vector<16x32xf32>
    %62 = arith.truncf %61 : vector<16x32xf32> to vector<16x32xbf16>
    %c0_32 = arith.constant 0 : index
    %c0_33 = arith.constant 0 : index
    %63 = vector.load %arg8[%c0_32, %c0_33] : memref<32x64xbf16, #tpu.memory_space<vmem>>, vector<32x64xbf16>
    %cst_34 = arith.constant dense<0.000000e+00> : vector<16x64xf32>
    %64 = tpu.matmul %62, %63, %cst_34 {dimension_numbers = #tpu.dot_dimension_numbers<[1], [0], [0], [1], [0, 0, 1, 1], [], []>} : vector<16x32xbf16>, vector<32x64xbf16>, vector<16x64xf32> -> vector<16x64xf32>
    %c0_35 = arith.constant 0 : index
    %c0_36 = arith.constant 0 : index
    %65 = vector.load %arg9[%c0_35, %c0_36] : memref<1x64xf32, #tpu.memory_space<vmem>>, vector<1x64xf32>
    %66 = vector.broadcast %65 : vector<1x64xf32> to vector<16x64xf32>
    %67 = arith.addf %64, %66 : vector<16x64xf32>
    %cst_37 = arith.constant 0.000000e+00 : f32
    %68 = vector.broadcast %cst_37 : f32 to vector<16x64xf32>
    %69 = arith.maximumf %67, %68 : vector<16x64xf32>
    %70 = arith.truncf %69 : vector<16x64xf32> to vector<16x64xbf16>
    %c0_38 = arith.constant 0 : index
    %c0_39 = arith.constant 0 : index
    %71 = vector.load %arg10[%c0_38, %c0_39] : memref<64x32xbf16, #tpu.memory_space<vmem>>, vector<64x32xbf16>
    %cst_40 = arith.constant dense<0.000000e+00> : vector<16x32xf32>
    %72 = tpu.matmul %70, %71, %cst_40 {dimension_numbers = #tpu.dot_dimension_numbers<[1], [0], [0], [1], [0, 0, 1, 1], [], []>} : vector<16x64xbf16>, vector<64x32xbf16>, vector<16x32xf32> -> vector<16x32xf32>
    %c0_41 = arith.constant 0 : index
    %c0_42 = arith.constant 0 : index
    %73 = vector.load %arg11[%c0_41, %c0_42] : memref<1x32xf32, #tpu.memory_space<vmem>>, vector<1x32xf32>
    %74 = vector.broadcast %73 : vector<1x32xf32> to vector<16x32xf32>
    %75 = arith.addf %72, %74 : vector<16x32xf32>
    %76 = arith.addf %61, %75 : vector<16x32xf32>
    %cst_43 = arith.constant dense<0.000000e+00> : vector<16xf32>
    %77 = vector.multi_reduction <add>, %76, %cst_43 [1] : vector<16x32xf32> to vector<16xf32>
    %78 = vector.shape_cast %77 : vector<16xf32> to vector<16x1xf32>
    %cst_44 = arith.constant 3.200000e+01 : f32
    %79 = vector.broadcast %cst_44 : f32 to vector<16x1xf32>
    %80 = arith.divf %78, %79 : vector<16x1xf32>
    %81 = vector.broadcast %80 : vector<16x1xf32> to vector<16x32xf32>
    %82 = arith.subf %76, %81 : vector<16x32xf32>
    %83 = arith.mulf %82, %82 : vector<16x32xf32>
    %cst_45 = arith.constant dense<0.000000e+00> : vector<16xf32>
    %84 = vector.multi_reduction <add>, %83, %cst_45 [1] : vector<16x32xf32> to vector<16xf32>
    %85 = vector.shape_cast %84 : vector<16xf32> to vector<16x1xf32>
    %cst_46 = arith.constant 3.200000e+01 : f32
    %86 = vector.broadcast %cst_46 : f32 to vector<16x1xf32>
    %87 = arith.divf %85, %86 : vector<16x1xf32>
    %88 = vector.broadcast %80 : vector<16x1xf32> to vector<16x32xf32>
    %89 = arith.subf %76, %88 : vector<16x32xf32>
    %cst_47 = arith.constant 9.99999974E-6 : f32
    %90 = vector.broadcast %cst_47 : f32 to vector<16x1xf32>
    %91 = arith.addf %87, %90 : vector<16x1xf32>
    %92 = math.rsqrt %91 : vector<16x1xf32>
    %93 = vector.broadcast %92 : vector<16x1xf32> to vector<16x32xf32>
    %94 = arith.mulf %89, %93 : vector<16x32xf32>
    %c0_48 = arith.constant 0 : index
    %c0_49 = arith.constant 0 : index
    %95 = vector.load %arg14[%c0_48, %c0_49] : memref<1x32xf32, #tpu.memory_space<vmem>>, vector<1x32xf32>
    %96 = vector.broadcast %95 : vector<1x32xf32> to vector<16x32xf32>
    %97 = arith.mulf %94, %96 : vector<16x32xf32>
    %c0_50 = arith.constant 0 : index
    %c0_51 = arith.constant 0 : index
    %98 = vector.load %arg15[%c0_50, %c0_51] : memref<1x32xf32, #tpu.memory_space<vmem>>, vector<1x32xf32>
    %99 = vector.broadcast %98 : vector<1x32xf32> to vector<16x32xf32>
    %100 = arith.addf %97, %99 : vector<16x32xf32>
    %c0_52 = arith.constant 0 : index
    %c0_53 = arith.constant 0 : index
    %c0_54 = arith.constant 0 : index
    %101 = vector.load %arg16[%c0_52, %c0_53, %c0_54] : memref<1x16x32xf32, #tpu.memory_space<vmem>>, vector<1x16x32xf32>
    %102 = vector.shape_cast %101 : vector<1x16x32xf32> to vector<16x32xf32>
    %103 = vector.shape_cast %100 : vector<16x32xf32> to vector<1x16x32xf32>
    tpu.vector_store %arg16[%c0_52, %c0_53, %c0_54], %103 {strides = array<i32>} : memref<1x16x32xf32, #tpu.memory_space<vmem>>, vector<1x16x32xf32>,
    return
  }
  func.func @transform_0(%arg0: i32, %arg1: i32) -> (i32, i32, i32) {
    %c0_i32 = arith.constant 0 : i32
    %c0_i32_0 = arith.constant 0 : i32
    return %arg0, %arg1, %c0_i32 : i32, i32, i32
  }
  func.func @transform_1(%arg0: i32, %arg1: i32) -> (i32, i32, i32) {
    %c0_i32 = arith.constant 0 : i32
    %c0_i32_0 = arith.constant 0 : i32
    %c0_i32_1 = arith.constant 0 : i32
    return %arg0, %c0_i32, %c0_i32_0 : i32, i32, i32
  }
  func.func @transform_2(%arg0: i32, %arg1: i32) -> (i32, i32) {
    %c0_i32 = arith.constant 0 : i32
    %c0_i32_0 = arith.constant 0 : i32
    %c0_i32_1 = arith.constant 0 : i32
    return %c0_i32, %c0_i32_0 : i32, i32
  }
  func.func @transform_3(%arg0: i32, %arg1: i32) -> (i32, i32) {
    %c0_i32 = arith.constant 0 : i32
    %c0_i32_0 = arith.constant 0 : i32
    %c0_i32_1 = arith.constant 0 : i32
    return %c0_i32, %c0_i32_0 : i32, i32
  }
  func.func @transform_4(%arg0: i32, %arg1: i32) -> (i32, i32) {
    %c0_i32 = arith.constant 0 : i32
    %c0_i32_0 = arith.constant 0 : i32
    %c0_i32_1 = arith.constant 0 : i32
    return %c0_i32, %c0_i32_0 : i32, i32
  }
  func.func @transform_5(%arg0: i32, %arg1: i32) -> (i32, i32) {
    %c0_i32 = arith.constant 0 : i32
    %c0_i32_0 = arith.constant 0 : i32
    %c0_i32_1 = arith.constant 0 : i32
    return %c0_i32, %c0_i32_0 : i32, i32
  }
  func.func @transform_6(%arg0: i32, %arg1: i32) -> (i32, i32) {
    %c0_i32 = arith.constant 0 : i32
    %c0_i32_0 = arith.constant 0 : i32
    %c0_i32_1 = arith.constant 0 : i32
    return %c0_i32, %c0_i32_0 : i32, i32
  }
  func.func @transform_7(%arg0: i32, %arg1: i32) -> (i32, i32) {
    %c0_i32 = arith.constant 0 : i32
    %c0_i32_0 = arith.constant 0 : i32
    %c0_i32_1 = arith.constant 0 : i32
    return %c0_i32, %c0_i32_0 : i32, i32
  }
  func.func @transform_8(%arg0: i32, %arg1: i32) -> (i32, i32) {
    %c0_i32 = arith.constant 0 : i32
    %c0_i32_0 = arith.constant 0 : i32
    %c0_i32_1 = arith.constant 0 : i32
    return %c0_i32, %c0_i32_0 : i32, i32
  }
  func.func @transform_9(%arg0: i32, %arg1: i32) -> (i32, i32) {
    %c0_i32 = arith.constant 0 : i32
    %c0_i32_0 = arith.constant 0 : i32
    %c0_i32_1 = arith.constant 0 : i32
    return %c0_i32, %c0_i32_0 : i32, i32
  }
  func.func @transform_10(%arg0: i32, %arg1: i32) -> (i32, i32) {
    %c0_i32 = arith.constant 0 : i32
    %c0_i32_0 = arith.constant 0 : i32
    %c0_i32_1 = arith.constant 0 : i32
    return %c0_i32, %c0_i32_0 : i32, i32
  }
  func.func @transform_11(%arg0: i32, %arg1: i32) -> (i32, i32) {
    %c0_i32 = arith.constant 0 : i32
    %c0_i32_0 = arith.constant 0 : i32
    %c0_i32_1 = arith.constant 0 : i32
    return %c0_i32, %c0_i32_0 : i32, i32
  }
  func.func @transform_12(%arg0: i32, %arg1: i32) -> (i32, i32) {
    %c0_i32 = arith.constant 0 : i32
    %c0_i32_0 = arith.constant 0 : i32
    %c0_i32_1 = arith.constant 0 : i32
    return %c0_i32, %c0_i32_0 : i32, i32
  }
  func.func @transform_13(%arg0: i32, %arg1: i32) -> (i32, i32) {
    %c0_i32 = arith.constant 0 : i32
    %c0_i32_0 = arith.constant 0 : i32
    %c0_i32_1 = arith.constant 0 : i32
    return %c0_i32, %c0_i32_0 : i32, i32
  }
  func.func @transform_14(%arg0: i32, %arg1: i32) -> (i32, i32, i32) {
    %c0_i32 = arith.constant 0 : i32
    %c0_i32_0 = arith.constant 0 : i32
    return %arg0, %arg1, %c0_i32 : i32, i32, i32
  }
  func.func @transform_15(%arg0: i32, %arg1: i32) -> (i32, i32, i32, i32) {
    %c0_i32 = arith.constant 0 : i32
    %c0_i32_0 = arith.constant 0 : i32
    %c0_i32_1 = arith.constant 0 : i32
    return %arg0, %c0_i32, %arg1, %c0_i32_0 : i32, i32, i32, i32
  }
}

</mosaic_0001>

<llo_original>
// kernel: tpu_custom_call.1
$region0: #{tpu_custom_call.1}
  #allocation0 [shape = 'u32[]', space=smem, size = 0x4, offset = 0x4, fixed_abs, tag = 'smem constant byte address 0x4 - core index']
  #allocation1 [shape = 'u32[72,128]{1,0:T(1,128)}', space=vmem, size = 0x9000, scoped, tag = 'internal scratch']
  #allocation2 [shape = 'bf16[2,16,16]{2,1,0:T(8,128)(2,1)}', space=vmem, size = 0x2000, scoped, tag = 'scratch operand']
  #allocation3 [shape = 'bf16[2,16,16]{2,1,0:T(8,128)(2,1)}', space=vmem, size = 0x2000, scoped, tag = 'scratch operand']
  %s0 = inlined_call_operand.vmem [shape: bf16[2,16,32], index: 0, kind: input, shape index: {}]
  %s1 = inlined_call_operand.vmem [shape: bf16[2,16,32], index: 1, kind: input, shape index: {}]
  %s2 = inlined_call_operand.vmem [shape: bf16[32,32], index: 2, kind: input, shape index: {}]
  %s3 = inlined_call_operand.hbm [shape: bf16[32,32], index: 3, kind: input, shape index: {}]
  %s4 = inlined_call_operand.hbm [shape: bf16[32,32], index: 4, kind: input, shape index: {}]
  %s5 = inlined_call_operand.hbm [shape: bf16[32,32], index: 5, kind: input, shape index: {}]
  %s6 = inlined_call_operand.hbm [shape: bf16[32,64], index: 6, kind: input, shape index: {}]
  %s7 = inlined_call_operand.vmem [shape: f32[1,64], index: 7, kind: input, shape index: {}]
  %s8 = inlined_call_operand.vmem [shape: bf16[64,32], index: 8, kind: input, shape index: {}]
  %s9 = inlined_call_operand.vmem [shape: f32[1,32], index: 9, kind: input, shape index: {}]
  %s10 = inlined_call_operand.vmem [shape: f32[1,32], index: 10, kind: input, shape index: {}]
  %s11 = inlined_call_operand.vmem [shape: f32[1,32], index: 11, kind: input, shape index: {}]
  %s12 = inlined_call_operand.vmem [shape: f32[1,32], index: 12, kind: input, shape index: {}]
  %s13 = inlined_call_operand.vmem [shape: f32[1,32], index: 13, kind: input, shape index: {}]
  %s14 = inlined_call_operand.hbm [shape: f32[2,16,32], index: 14, kind: output, shape index: {0}]
  %s15 = inlined_call_operand.hbm [shape: bf16[2,2,16,16], index: 15, kind: output, shape index: {1}]
  %16 = xla_tuple %s14, %s15
  %s17 = sld [smem:[#allocation0]]
  $region117: #{tpu_custom_call.1} parent=0
    _
  %s19 = ssub.s32 1, %s17
  %s20 = scalar_select 0, %s19, %s17
  $region1: #{tpu_custom_call.1} parent=0
    #allocation4 [shape = 'u8[8192]{0}', space=vmem, size = 0x2000, scoped, tag = 'input window, operand 3, single buffered']
    #allocation5 [shape = 's32[2]{0}', space=sflag, size = 0x8, scoped, tag = 'scoped memory for tpu_custom_call.1']
    #allocation6 [shape = 's32[2]{0}', space=sflag, size = 0x8, scoped, tag = 'scoped memory for tpu_custom_call.1']
    #allocation7 [shape = 'u8[8192]{0}', space=vmem, size = 0x2000, scoped, tag = 'input window, operand 4, single buffered']
    #allocation8 [shape = 's32[1]{0}', space=sflag, size = 0x4, scoped, tag = 'scoped memory for tpu_custom_call.1']
    #allocation9 [shape = 'u8[8192]{0}', space=vmem, size = 0x2000, scoped, tag = 'input window, operand 5, single buffered']
    #allocation10 [shape = 'u8[8192]{0}', space=vmem, size = 0x2000, scoped, tag = 'input window, operand 6, single buffered']
    #allocation11 [shape = 's32[1]{0}', space=sflag, size = 0x4, scoped, tag = 'scoped memory for tpu_custom_call.1']
    #allocation12 [shape = 'u8[16384]{0}', space=vmem, size = 0x4000, scoped, tag = 'output window, operand 0']
    #allocation13 [shape = 'u8[16384]{0}', space=vmem, size = 0x4000, scoped, tag = 'output window, operand 1']
    #allocation14 [shape = 's32[2]{0}', space=sflag, size = 0x8, scoped, tag = 'scoped memory for tpu_custom_call.1']
    %21 = vsyncpa [#allocation5], 0
    %22 = vsyncpa [#allocation8], 0
    %23 = vsyncpa [#allocation11], 0
    %24 = vsyncpa [#allocation6], 0
    %s25 = scalar_lea.sflag [#allocation6], 1
    %26 = vsyncpa %s25, 0
    %27 = vsyncpa [#allocation14], 0
    %s28 = scalar_lea.sflag [#allocation14], 1
    %29 = vsyncpa %s28, 0
    loop: start=0, step=1, limit=4
    $region2: #{tpu_custom_call.1} parent=1 // loop_pre_header
      _
    $region3: #{tpu_custom_call.1} parent=1 // loop_header
      %s31 = sphi 0, %s35
      %p32 = scmp.ge.s32.totalorder %s31, 4
      %s38 = sphi 0, %s50
      %s39 = sphi 0, %s46
      %s40 = sphi 0, %s38
      %s41 = sphi 0, %s39
      %s42 = sphi 0, %s40
      %s43 = sphi 0, %s41
      %s55 = sphi 0, %s57
      %s58 = sphi 0, %s55
      %s59 = sphi 0, %s58
      %s75 = sphi 0, %s59
      %s81 = sphi 0, %s83
      %s84 = sphi 0, %s81
      %s85 = sphi 0, %s84
      %s101 = sphi 0, %s85
      %s105 = sphi 0, %s105
      %s107 = sphi 0, %s105
      %s108 = sphi 0, %s107
      %s122 = sphi 0, %s108
      %s126 = sphi 0, %s126
      %s128 = sphi 0, %s126
      %s129 = sphi 0, %s128
      %s143 = sphi 0, %s129
      %s147 = sphi 0, %s147
      %s149 = sphi 0, %s147
      %s150 = sphi 0, %s149
      %s164 = sphi 0, %s150
      %s168 = sphi 0, %s168
      %s170 = sphi 0, %s168
      %s171 = sphi 0, %s170
      %s185 = sphi 0, %s171
      %s189 = sphi 0, %s189
      %s191 = sphi 0, %s189
      %s192 = sphi 0, %s191
      %s206 = sphi 0, %s192
      %s210 = sphi 0, %s210
      %s212 = sphi 0, %s210
      %s213 = sphi 0, %s212
      %s227 = sphi 0, %s213
      %s231 = sphi 0, %s231
      %s233 = sphi 0, %s231
      %s234 = sphi 0, %s233
      %s248 = sphi 0, %s234
      %s252 = sphi 0, %s252
      %s254 = sphi 0, %s252
      %s255 = sphi 0, %s254
      %s269 = sphi 0, %s255
      %s273 = sphi 0, %s273
      %s275 = sphi 0, %s273
      %s276 = sphi 0, %s275
      %s290 = sphi 0, %s276
      %s294 = sphi 0, %s294
      %s296 = sphi 0, %s294
      %s297 = sphi 0, %s296
      %s311 = sphi 0, %s297
      %s315 = sphi 0, %s315
      %s317 = sphi 0, %s315
      %s318 = sphi 0, %s317
      %s332 = sphi 0, %s318
      %s336 = sphi 0, %s336
      %s338 = sphi 0, %s336
      %s339 = sphi 0, %s338
      %s353 = sphi 0, %s339
      %s361 = sphi 0, %s363
      %s364 = sphi 0, %s361
      %s365 = sphi 0, %s364
      %s381 = sphi 0, %s365
      %s389 = sphi 0, %s391
      %s392 = sphi 0, %s389
      %s393 = sphi 0, %s392
      %s409 = sphi 0, %s393
    $region4: #{tpu_custom_call.1} parent=1 // loop_header_branch
      %34 = sbr.rel (%p32) target = $region8
    $region5: #{tpu_custom_call.1} parent=1 // loop_body
      %s36 = ssub.s32 %s31, 1
      %s37 = ssub.s32 %s31, 2
      %s44 = sadd.s32 1, %s39
      %p45 = scmp.ge.s32.totalorder %s44, 1
      %s46 = scalar_select %p45, 0, %s44
      %s47 = sadd.s32 1, %s38
      %s48 = scalar_select %p45, %s47, %s38
      %p49 = scmp.ge.s32.totalorder %s48, 2
      %s50 = scalar_select %p49, 0, %s48
      %s51 = ssub.s32 %s38, %s50
      %s52 = ssub.s32 %s39, %s46
      %s53 = sor.u32 %s51, %s52
      %p54 = scmp.eq.s32.totalorder %s53, 0
      %s56 = sadd.s32 %s55, 1
      %s57 = scalar_select %p54, %s55, %s56
      %p60 = pneg %p54
      %p61 = scmp.eq.s32.totalorder %s31, 1
      %p62 = por %p60, %p61
      %p63 = scmp.ne.s32.totalorder %s55, %s58
      %p64 = scmp.eq.s32.totalorder %s31, 0
      %p65 = por %p63, %p64
      %p66 = scmp.ne.s32.totalorder %s55, %s58
      %p67 = scmp.eq.s32.totalorder %s36, 1
      %p68 = por %p66, %p67
      %p69 = scmp.ne.s32.totalorder %s58, %s59
      %p70 = scmp.eq.s32.totalorder %s36, 0
      %p71 = por %p69, %p70
      %p72 = scmp.ne.s32.totalorder %s58, %s59
      %p73 = scmp.eq.s32.totalorder %s37, 1
      %p74 = por %p72, %p73
      %p76 = scmp.ne.s32.totalorder %s59, %s75
      %p77 = scmp.eq.s32.totalorder %s37, 0
      %p78 = por %p76, %p77
      %s79 = ssub.s32 %s38, %s50
      %p80 = scmp.eq.s32.totalorder %s79, 0
      %s82 = sadd.s32 %s81, 1
      %s83 = scalar_select %p80, %s81, %s82
      %p86 = pneg %p80
      %p87 = scmp.eq.s32.totalorder %s31, 1
      %p88 = por %p86, %p87
      %p89 = scmp.ne.s32.totalorder %s81, %s84
      %p90 = scmp.eq.s32.totalorder %s31, 0
      %p91 = por %p89, %p90
      %p92 = scmp.ne.s32.totalorder %s81, %s84
      %p93 = scmp.eq.s32.totalorder %s36, 1
      %p94 = por %p92, %p93
      %p95 = scmp.ne.s32.totalorder %s84, %s85
      %p96 = scmp.eq.s32.totalorder %s36, 0
      %p97 = por %p95, %p96
      %p98 = scmp.ne.s32.totalorder %s84, %s85
      %p99 = scmp.eq.s32.totalorder %s37, 1
      %p100 = por %p98, %p99
      %p102 = scmp.ne.s32.totalorder %s85, %s101
      %p103 = scmp.eq.s32.totalorder %s37, 0
      %p104 = por %p102, %p103
      %s106 = sadd.s32 %s105, 1
      %p109 = scmp.eq.s32.totalorder %s31, 1
      %p110 = scmp.ne.s32.totalorder %s105, %s107
      %p111 = scmp.eq.s32.totalorder %s31, 0
      %p112 = por %p110, %p111
      %p113 = scmp.ne.s32.totalorder %s105, %s107
      %p114 = scmp.eq.s32.totalorder %s36, 1
      %p115 = por %p113, %p114
      %p116 = scmp.ne.s32.totalorder %s107, %s108
      %p117 = scmp.eq.s32.totalorder %s36, 0
      %p118 = por %p116, %p117
      %p119 = scmp.ne.s32.totalorder %s107, %s108
      %p120 = scmp.eq.s32.totalorder %s37, 1
      %p121 = por %p119, %p120
      %p123 = scmp.ne.s32.totalorder %s108, %s122
      %p124 = scmp.eq.s32.totalorder %s37, 0
      %p125 = por %p123, %p124
      %s127 = sadd.s32 %s126, 1
      %p130 = scmp.eq.s32.totalorder %s31, 1
      %p131 = scmp.ne.s32.totalorder %s126, %s128
      %p132 = scmp.eq.s32.totalorder %s31, 0
      %p133 = por %p131, %p132
      %p134 = scmp.ne.s32.totalorder %s126, %s128
      %p135 = scmp.eq.s32.totalorder %s36, 1
      %p136 = por %p134, %p135
      %p137 = scmp.ne.s32.totalorder %s128, %s129
      %p138 = scmp.eq.s32.totalorder %s36, 0
      %p139 = por %p137, %p138
      %p140 = scmp.ne.s32.totalorder %s128, %s129
      %p141 = scmp.eq.s32.totalorder %s37, 1
      %p142 = por %p140, %p141
      %p144 = scmp.ne.s32.totalorder %s129, %s143
      %p145 = scmp.eq.s32.totalorder %s37, 0
      %p146 = por %p144, %p145
      %s148 = sadd.s32 %s147, 1
      %p151 = scmp.eq.s32.totalorder %s31, 1
      %p152 = scmp.ne.s32.totalorder %s147, %s149
      %p153 = scmp.eq.s32.totalorder %s31, 0
      %p154 = por %p152, %p153
      %p155 = scmp.ne.s32.totalorder %s147, %s149
      %p156 = scmp.eq.s32.totalorder %s36, 1
      %p157 = por %p155, %p156
      %p158 = scmp.ne.s32.totalorder %s149, %s150
      %p159 = scmp.eq.s32.totalorder %s36, 0
      %p160 = por %p158, %p159
      %p161 = scmp.ne.s32.totalorder %s149, %s150
      %p162 = scmp.eq.s32.totalorder %s37, 1
      %p163 = por %p161, %p162
      %p165 = scmp.ne.s32.totalorder %s150, %s164
      %p166 = scmp.eq.s32.totalorder %s37, 0
      %p167 = por %p165, %p166
      %s169 = sadd.s32 %s168, 1
      %p172 = scmp.eq.s32.totalorder %s31, 1
      %p173 = scmp.ne.s32.totalorder %s168, %s170
      %p174 = scmp.eq.s32.totalorder %s31, 0
      %p175 = por %p173, %p174
      %p176 = scmp.ne.s32.totalorder %s168, %s170
      %p177 = scmp.eq.s32.totalorder %s36, 1
      %p178 = por %p176, %p177
      %p179 = scmp.ne.s32.totalorder %s170, %s171
      %p180 = scmp.eq.s32.totalorder %s36, 0
      %p181 = por %p179, %p180
      %p182 = scmp.ne.s32.totalorder %s170, %s171
      %p183 = scmp.eq.s32.totalorder %s37, 1
      %p184 = por %p182, %p183
      %p186 = scmp.ne.s32.totalorder %s171, %s185
      %p187 = scmp.eq.s32.totalorder %s37, 0
      %p188 = por %p186, %p187
      %s190 = sadd.s32 %s189, 1
      %p193 = scmp.eq.s32.totalorder %s31, 1
      %p194 = scmp.ne.s32.totalorder %s189, %s191
      %p195 = scmp.eq.s32.totalorder %s31, 0
      %p196 = por %p194, %p195
      %p197 = scmp.ne.s32.totalorder %s189, %s191
      %p198 = scmp.eq.s32.totalorder %s36, 1
      %p199 = por %p197, %p198
      %p200 = scmp.ne.s32.totalorder %s191, %s192
      %p201 = scmp.eq.s32.totalorder %s36, 0
      %p202 = por %p200, %p201
      %p203 = scmp.ne.s32.totalorder %s191, %s192
      %p204 = scmp.eq.s32.totalorder %s37, 1
      %p205 = por %p203, %p204
      %p207 = scmp.ne.s32.totalorder %s192, %s206
      %p208 = scmp.eq.s32.totalorder %s37, 0
      %p209 = por %p207, %p208
      %s211 = sadd.s32 %s210, 1
      %p214 = scmp.eq.s32.totalorder %s31, 1
      %p215 = scmp.ne.s32.totalorder %s210, %s212
      %p216 = scmp.eq.s32.totalorder %s31, 0
      %p217 = por %p215, %p216
      %p218 = scmp.ne.s32.totalorder %s210, %s212
      %p219 = scmp.eq.s32.totalorder %s36, 1
      %p220 = por %p218, %p219
      %p221 = scmp.ne.s32.totalorder %s212, %s213
      %p222 = scmp.eq.s32.totalorder %s36, 0
      %p223 = por %p221, %p222
      %p224 = scmp.ne.s32.totalorder %s212, %s213
      %p225 = scmp.eq.s32.totalorder %s37, 1
      %p226 = por %p224, %p225
      %p228 = scmp.ne.s32.totalorder %s213, %s227
      %p229 = scmp.eq.s32.totalorder %s37, 0
      %p230 = por %p228, %p229
      %s232 = sadd.s32 %s231, 1
      %p235 = scmp.eq.s32.totalorder %s31, 1
      %p236 = scmp.ne.s32.totalorder %s231, %s233
      %p237 = scmp.eq.s32.totalorder %s31, 0
      %p238 = por %p236, %p237
      %p239 = scmp.ne.s32.totalorder %s231, %s233
      %p240 = scmp.eq.s32.totalorder %s36, 1
      %p241 = por %p239, %p240
      %p242 = scmp.ne.s32.totalorder %s233, %s234
      %p243 = scmp.eq.s32.totalorder %s36, 0
      %p244 = por %p242, %p243
      %p245 = scmp.ne.s32.totalorder %s233, %s234
      %p246 = scmp.eq.s32.totalorder %s37, 1
      %p247 = por %p245, %p246
      %p249 = scmp.ne.s32.totalorder %s234, %s248
      %p250 = scmp.eq.s32.totalorder %s37, 0
      %p251 = por %p249, %p250
      %s253 = sadd.s32 %s252, 1
      %p256 = scmp.eq.s32.totalorder %s31, 1
      %p257 = scmp.ne.s32.totalorder %s252, %s254
      %p258 = scmp.eq.s32.totalorder %s31, 0
      %p259 = por %p257, %p258
      %p260 = scmp.ne.s32.totalorder %s252, %s254
      %p261 = scmp.eq.s32.totalorder %s36, 1
      %p262 = por %p260, %p261
      %p263 = scmp.ne.s32.totalorder %s254, %s255
      %p264 = scmp.eq.s32.totalorder %s36, 0
      %p265 = por %p263, %p264
      %p266 = scmp.ne.s32.totalorder %s254, %s255
      %p267 = scmp.eq.s32.totalorder %s37, 1
      %p268 = por %p266, %p267
      %p270 = scmp.ne.s32.totalorder %s255, %s269
      %p271 = scmp.eq.s32.totalorder %s37, 0
      %p272 = por %p270, %p271
      %s274 = sadd.s32 %s273, 1
      %p277 = scmp.eq.s32.totalorder %s31, 1
      %p278 = scmp.ne.s32.totalorder %s273, %s275
      %p279 = scmp.eq.s32.totalorder %s31, 0
      %p280 = por %p278, %p279
      %p281 = scmp.ne.s32.totalorder %s273, %s275
      %p282 = scmp.eq.s32.totalorder %s36, 1
      %p283 = por %p281, %p282
      %p284 = scmp.ne.s32.totalorder %s275, %s276
      %p285 = scmp.eq.s32.totalorder %s36, 0
      %p286 = por %p284, %p285
      %p287 = scmp.ne.s32.totalorder %s275, %s276
      %p288 = scmp.eq.s32.totalorder %s37, 1
      %p289 = por %p287, %p288
      %p291 = scmp.ne.s32.totalorder %s276, %s290
      %p292 = scmp.eq.s32.totalorder %s37, 0
      %p293 = por %p291, %p292
      %s295 = sadd.s32 %s294, 1
      %p298 = scmp.eq.s32.totalorder %s31, 1
      %p299 = scmp.ne.s32.totalorder %s294, %s296
      %p300 = scmp.eq.s32.totalorder %s31, 0
      %p301 = por %p299, %p300
      %p302 = scmp.ne.s32.totalorder %s294, %s296
      %p303 = scmp.eq.s32.totalorder %s36, 1
      %p304 = por %p302, %p303
      %p305 = scmp.ne.s32.totalorder %s296, %s297
      %p306 = scmp.eq.s32.totalorder %s36, 0
      %p307 = por %p305, %p306
      %p308 = scmp.ne.s32.totalorder %s296, %s297
      %p309 = scmp.eq.s32.totalorder %s37, 1
      %p310 = por %p308, %p309
      %p312 = scmp.ne.s32.totalorder %s297, %s311
      %p313 = scmp.eq.s32.totalorder %s37, 0
      %p314 = por %p312, %p313
      %s316 = sadd.s32 %s315, 1
      %p319 = scmp.eq.s32.totalorder %s31, 1
      %p320 = scmp.ne.s32.totalorder %s315, %s317
      %p321 = scmp.eq.s32.totalorder %s31, 0
      %p322 = por %p320, %p321
      %p323 = scmp.ne.s32.totalorder %s315, %s317
      %p324 = scmp.eq.s32.totalorder %s36, 1
      %p325 = por %p323, %p324
      %p326 = scmp.ne.s32.totalorder %s317, %s318
      %p327 = scmp.eq.s32.totalorder %s36, 0
      %p328 = por %p326, %p327
      %p329 = scmp.ne.s32.totalorder %s317, %s318
      %p330 = scmp.eq.s32.totalorder %s37, 1
      %p331 = por %p329, %p330
      %p333 = scmp.ne.s32.totalorder %s318, %s332
      %p334 = scmp.eq.s32.totalorder %s37, 0
      %p335 = por %p333, %p334
      %s337 = sadd.s32 %s336, 1
      %p340 = scmp.eq.s32.totalorder %s31, 1
      %p341 = scmp.ne.s32.totalorder %s336, %s338
      %p342 = scmp.eq.s32.totalorder %s31, 0
      %p343 = por %p341, %p342
      %p344 = scmp.ne.s32.totalorder %s336, %s338
      %p345 = scmp.eq.s32.totalorder %s36, 1
      %p346 = por %p344, %p345
      %p347 = scmp.ne.s32.totalorder %s338, %s339
      %p348 = scmp.eq.s32.totalorder %s36, 0
      %p349 = por %p347, %p348
      %p350 = scmp.ne.s32.totalorder %s338, %s339
      %p351 = scmp.eq.s32.totalorder %s37, 1
      %p352 = por %p350, %p351
      %p354 = scmp.ne.s32.totalorder %s339, %s353
      %p355 = scmp.eq.s32.totalorder %s37, 0
      %p356 = por %p354, %p355
      %s357 = ssub.s32 %s38, %s50
      %s358 = ssub.s32 %s39, %s46
      %s359 = sor.u32 %s357, %s358
      %p360 = scmp.eq.s32.totalorder %s359, 0
      %s362 = sadd.s32 %s361, 1
      %s363 = scalar_select %p360, %s361, %s362
      %p366 = pneg %p360
      %p367 = scmp.eq.s32.totalorder %s31, 1
      %p368 = por %p366, %p367
      %p369 = scmp.ne.s32.totalorder %s361, %s364
      %p370 = scmp.eq.s32.totalorder %s31, 0
      %p371 = por %p369, %p370
      %p372 = scmp.ne.s32.totalorder %s361, %s364
      %p373 = scmp.eq.s32.totalorder %s36, 1
      %p374 = por %p372, %p373
      %p375 = scmp.ne.s32.totalorder %s364, %s365
      %p376 = scmp.eq.s32.totalorder %s36, 0
      %p377 = por %p375, %p376
      %p378 = scmp.ne.s32.totalorder %s364, %s365
      %p379 = scmp.eq.s32.totalorder %s37, 1
      %p380 = por %p378, %p379
      %p382 = scmp.ne.s32.totalorder %s365, %s381
      %p383 = scmp.eq.s32.totalorder %s37, 0
      %p384 = por %p382, %p383
      %s385 = ssub.s32 %s38, %s50
      %s386 = ssub.s32 %s39, %s46
      %s387 = sor.u32 %s385, %s386
      %p388 = scmp.eq.s32.totalorder %s387, 0
      %s390 = sadd.s32 %s389, 1
      %s391 = scalar_select %p388, %s389, %s390
      %p394 = pneg %p388
      %p395 = scmp.eq.s32.totalorder %s31, 1
      %p396 = por %p394, %p395
      %p397 = scmp.ne.s32.totalorder %s389, %s392
      %p398 = scmp.eq.s32.totalorder %s31, 0
      %p399 = por %p397, %p398
      %p400 = scmp.ne.s32.totalorder %s389, %s392
      %p401 = scmp.eq.s32.totalorder %s36, 1
      %p402 = por %p400, %p401
      %p403 = scmp.ne.s32.totalorder %s392, %s393
      %p404 = scmp.eq.s32.totalorder %s36, 0
      %p405 = por %p403, %p404
      %p406 = scmp.ne.s32.totalorder %s392, %s393
      %p407 = scmp.eq.s32.totalorder %s37, 1
      %p408 = por %p406, %p407
      %p410 = scmp.ne.s32.totalorder %s393, %s409
      %p411 = scmp.eq.s32.totalorder %s37, 0
      %p412 = por %p410, %p411
      %p413 = scmp.le.s32.totalorder 1, %s31
      %p414 = scmp.lt.s32.totalorder %s31, 3
      %p415 = pnand %p413, %p414
      %p416 = pneg %p415
      // Predicated region
      $region9: #{tpu_custom_call.1} parent=5 // pred_check
        _
      $region10: #{tpu_custom_call.1} parent=5 // pred_check_branch
        %418 = sbr.rel (%p415) target = $region12
      $region11: #{tpu_custom_call.1} parent=5 // pred_region
        %s419 = ssub.s32 %s31, 1
        // Predicated region
        $region13: #{tpu_custom_call.1} parent=11 // pred_check
          %p420 = pneg %p118
        $region14: #{tpu_custom_call.1} parent=11 // pred_check_branch
          %422 = sbr.rel (%p420) target = $region16
        $region15: #{tpu_custom_call.1} parent=11 // pred_region
          _
        $region16: #{tpu_custom_call.1} parent=11 // pred_fallthru
          _
        // Predicated region
        $region17: #{tpu_custom_call.1} parent=11 // pred_check
          %p423 = pneg %p139
        $region18: #{tpu_custom_call.1} parent=11 // pred_check_branch
          %425 = sbr.rel (%p423) target = $region20
        $region19: #{tpu_custom_call.1} parent=11 // pred_region
          %427 = vsyncadd [#allocation5], 0
          %s428 = sshll.u32 %s3, 4
          %s429 = int_to_ptr.hbm [resolvable:$true] %s428
          %s430 = sshll.u32 [#allocation4], 4
          %s431 = int_to_ptr.vmem [resolvable:$true] %s430
          %436 = dma.hbm_to_vmem [thread:$0]  %s429, 256, %s431, [#allocation5], 64, 64, 4
        $region20: #{tpu_custom_call.1} parent=11 // pred_fallthru
          _
        // Predicated region
        $region21: #{tpu_custom_call.1} parent=11 // pred_check
          %p437 = pneg %p160
        $region22: #{tpu_custom_call.1} parent=11 // pred_check_branch
          %439 = sbr.rel (%p437) target = $region24
        $region23: #{tpu_custom_call.1} parent=11 // pred_region
          %441 = vsyncadd [#allocation8], 0
          %s442 = sshll.u32 %s4, 4
          %s443 = int_to_ptr.hbm [resolvable:$true] %s442
          %s444 = sshll.u32 [#allocation7], 4
          %s445 = int_to_ptr.vmem [resolvable:$true] %s444
          %450 = dma.hbm_to_vmem [thread:$0]  %s443, 256, %s445, [#allocation8], 64, 64, 4
        $region24: #{tpu_custom_call.1} parent=11 // pred_fallthru
          _
        // Predicated region
        $region25: #{tpu_custom_call.1} parent=11 // pred_check
          %p451 = pneg %p181
        $region26: #{tpu_custom_call.1} parent=11 // pred_check_branch
          %453 = sbr.rel (%p451) target = $region28
        $region27: #{tpu_custom_call.1} parent=11 // pred_region
          %455 = vsyncadd [#allocation8], 0
          %s456 = sshll.u32 %s5, 4
          %s457 = int_to_ptr.hbm [resolvable:$true] %s456
          %s458 = sshll.u32 [#allocation9], 4
          %s459 = int_to_ptr.vmem [resolvable:$true] %s458
          %464 = dma.hbm_to_vmem [thread:$0]  %s457, 256, %s459, [#allocation8], 64, 64, 4
        $region28: #{tpu_custom_call.1} parent=11 // pred_fallthru
          _
        // Predicated region
        $region29: #{tpu_custom_call.1} parent=11 // pred_check
          %p465 = pneg %p202
        $region30: #{tpu_custom_call.1} parent=11 // pred_check_branch
          %467 = sbr.rel (%p465) target = $region32
        $region31: #{tpu_custom_call.1} parent=11 // pred_region
          %469 = vsyncadd [#allocation11], 0
          %s470 = sshll.u32 %s6, 4
          %s471 = int_to_ptr.hbm [resolvable:$true] %s470
          %s472 = sshll.u32 [#allocation10], 4
          %s473 = int_to_ptr.vmem [resolvable:$true] %s472
          %478 = dma.hbm_to_vmem [thread:$0]  %s471, 256, %s473, [#allocation11], 64, 64, 4
        $region32: #{tpu_custom_call.1} parent=11 // pred_fallthru
          _
        // Predicated region
        $region33: #{tpu_custom_call.1} parent=11 // pred_check
          %p479 = pneg %p223
        $region34: #{tpu_custom_call.1} parent=11 // pred_check_branch
          %481 = sbr.rel (%p479) target = $region36
        $region35: #{tpu_custom_call.1} parent=11 // pred_region
          _
        $region36: #{tpu_custom_call.1} parent=11 // pred_fallthru
          _
        // Predicated region
        $region37: #{tpu_custom_call.1} parent=11 // pred_check
          %p482 = pneg %p244
        $region38: #{tpu_custom_call.1} parent=11 // pred_check_branch
          %484 = sbr.rel (%p482) target = $region40
        $region39: #{tpu_custom_call.1} parent=11 // pred_region
          _
        $region40: #{tpu_custom_call.1} parent=11 // pred_fallthru
          _
        // Predicated region
        $region41: #{tpu_custom_call.1} parent=11 // pred_check
          %p485 = pneg %p265
        $region42: #{tpu_custom_call.1} parent=11 // pred_check_branch
          %487 = sbr.rel (%p485) target = $region44
        $region43: #{tpu_custom_call.1} parent=11 // pred_region
          _
        $region44: #{tpu_custom_call.1} parent=11 // pred_fallthru
          _
        // Predicated region
        $region45: #{tpu_custom_call.1} parent=11 // pred_check
          %p488 = pneg %p286
        $region46: #{tpu_custom_call.1} parent=11 // pred_check_branch
          %490 = sbr.rel (%p488) target = $region48
        $region47: #{tpu_custom_call.1} parent=11 // pred_region
          _
        $region48: #{tpu_custom_call.1} parent=11 // pred_fallthru
          _
        // Predicated region
        $region49: #{tpu_custom_call.1} parent=11 // pred_check
          %p491 = pneg %p307
        $region50: #{tpu_custom_call.1} parent=11 // pred_check_branch
          %493 = sbr.rel (%p491) target = $region52
        $region51: #{tpu_custom_call.1} parent=11 // pred_region
          _
        $region52: #{tpu_custom_call.1} parent=11 // pred_fallthru
          _
        // Predicated region
        $region53: #{tpu_custom_call.1} parent=11 // pred_check
          %p494 = pneg %p328
        $region54: #{tpu_custom_call.1} parent=11 // pred_check_branch
          %496 = sbr.rel (%p494) target = $region56
        $region55: #{tpu_custom_call.1} parent=11 // pred_region
          _
        $region56: #{tpu_custom_call.1} parent=11 // pred_fallthru
          _
        // Predicated region
        $region57: #{tpu_custom_call.1} parent=11 // pred_check
          %p497 = pneg %p349
        $region58: #{tpu_custom_call.1} parent=11 // pred_check_branch
          %499 = sbr.rel (%p497) target = $region60
        $region59: #{tpu_custom_call.1} parent=11 // pred_region
          _
        $region60: #{tpu_custom_call.1} parent=11 // pred_fallthru
          _
      $region12: #{tpu_custom_call.1} parent=5 // pred_fallthru
        _
      %p500 = scmp.lt.s32.totalorder %s31, 2
      // Predicated region
      $region61: #{tpu_custom_call.1} parent=5 // pred_check
        %p501 = pneg %p500
      $region62: #{tpu_custom_call.1} parent=5 // pred_check_branch
        %503 = sbr.rel (%p501) target = $region64
      $region63: #{tpu_custom_call.1} parent=5 // pred_region
        // Predicated region
        $region65: #{tpu_custom_call.1} parent=63 // pred_check
          %p504 = pneg %p65
        $region66: #{tpu_custom_call.1} parent=63 // pred_check_branch
          %506 = sbr.rel (%p504) target = $region68
        $region67: #{tpu_custom_call.1} parent=63 // pred_region
          %s507 = smul.u32 2, %s39
          %p508 = scmp.lt.s32.totalorder %s38, 1
          %s509 = scalar_select %p508, %s38, 1
          %p510 = scmp.lt.s32.totalorder %s507, 1
          %s511 = scalar_select %p510, %s507, 1
          %s512 = smul.addr %s509, 2
          %s513 = sadd.s32 %s511, %s512
          %s514 = smul.addr %s513, 4
          %s515 = scalar_lea.vmem %s0, %s514
          %s516 = smul.u32 2, %s39
        $region68: #{tpu_custom_call.1} parent=63 // pred_fallthru
          _
        // Predicated region
        $region69: #{tpu_custom_call.1} parent=63 // pred_check
          %p517 = pneg %p91
        $region70: #{tpu_custom_call.1} parent=63 // pred_check_branch
          %519 = sbr.rel (%p517) target = $region72
        $region71: #{tpu_custom_call.1} parent=63 // pred_region
          %p520 = scmp.lt.s32.totalorder %s38, 1
          %s521 = scalar_select %p520, %s38, 1
          %s522 = smul.addr %s521, 2
          %s523 = smul.addr %s522, 4
          %s524 = scalar_lea.vmem %s1, %s523
        $region72: #{tpu_custom_call.1} parent=63 // pred_fallthru
          _
      $region64: #{tpu_custom_call.1} parent=5 // pred_fallthru
        _
      %p525 = scmp.le.s32.totalorder 1, %s31
      %p526 = scmp.lt.s32.totalorder %s31, 3
      %p527 = pnand %p525, %p526
      %p528 = pneg %p527
      // Predicated region
      $region73: #{tpu_custom_call.1} parent=5 // pred_check
        _
      $region74: #{tpu_custom_call.1} parent=5 // pred_check_branch
        %530 = sbr.rel (%p527) target = $region76
      $region75: #{tpu_custom_call.1} parent=5 // pred_region
        %s531 = ssub.s32 %s31, 1
        // Predicated region
        $region77: #{tpu_custom_call.1} parent=75 // pred_check
          %p532 = pneg %p139
        $region78: #{tpu_custom_call.1} parent=75 // pred_check_branch
          %534 = sbr.rel (%p532) target = $region80
        $region79: #{tpu_custom_call.1} parent=75 // pred_region
          %536 = dma.done [#allocation5], 256
        $region80: #{tpu_custom_call.1} parent=75 // pred_fallthru
          _
        // Predicated region
        $region81: #{tpu_custom_call.1} parent=75 // pred_check
          %p537 = pneg %p160
        $region82: #{tpu_custom_call.1} parent=75 // pred_check_branch
          %539 = sbr.rel (%p537) target = $region84
        $region83: #{tpu_custom_call.1} parent=75 // pred_region
          %541 = dma.done [#allocation8], 256
        $region84: #{tpu_custom_call.1} parent=75 // pred_fallthru
          _
        // Predicated region
        $region85: #{tpu_custom_call.1} parent=75 // pred_check
          %p542 = pneg %p181
        $region86: #{tpu_custom_call.1} parent=75 // pred_check_branch
          %544 = sbr.rel (%p542) target = $region88
        $region87: #{tpu_custom_call.1} parent=75 // pred_region
          %546 = dma.done [#allocation8], 256
        $region88: #{tpu_custom_call.1} parent=75 // pred_fallthru
          _
        // Predicated region
        $region89: #{tpu_custom_call.1} parent=75 // pred_check
          %p547 = pneg %p202
        $region90: #{tpu_custom_call.1} parent=75 // pred_check_branch
          %549 = sbr.rel (%p547) target = $region92
        $region91: #{tpu_custom_call.1} parent=75 // pred_region
          %551 = dma.done [#allocation11], 256
        $region92: #{tpu_custom_call.1} parent=75 // pred_fallthru
          _
        %s552 = smul.u32 2, %s41
        %p553 = scmp.lt.s32.totalorder %s40, 1
        %s554 = scalar_select %p553, %s40, 1
        %p555 = scmp.lt.s32.totalorder %s552, 1
        %s556 = scalar_select %p555, %s552, 1
        %s557 = smul.addr %s554, 2
        %s558 = sadd.s32 %s556, %s557
        %s559 = smul.addr %s558, 4
        %s560 = scalar_lea.vmem %s0, %s559
        %p561 = pneg %p71
        %p562 = pneg %p68
        %p563 = scmp.lt.s32.totalorder %s40, 1
        %s564 = scalar_select %p563, %s40, 1
        %s565 = smul.addr %s564, 2
        %s566 = smul.addr %s565, 4
        %s567 = scalar_lea.vmem %s1, %s566
        %p568 = pneg %p97
        %p569 = pneg %p94
        %p570 = pneg %p118
        %p571 = pneg %p115
        %p572 = pneg %p139
        %p573 = pneg %p136
        %p574 = pneg %p160
        %p575 = pneg %p157
        %p576 = pneg %p181
        %p577 = pneg %p178
        %p578 = pneg %p202
        %p579 = pneg %p199
        %p580 = pneg %p223
        %p581 = pneg %p220
        %p582 = pneg %p244
        %p583 = pneg %p241
        %p584 = pneg %p265
        %p585 = pneg %p262
        %p586 = pneg %p286
        %p587 = pneg %p283
        %p588 = pneg %p307
        %p589 = pneg %p304
        %p590 = pneg %p328
        %p591 = pneg %p325
        %p592 = pneg %p349
        %p593 = pneg %p346
        %p594 = pneg %p377
        %p595 = pneg %p374
        %s596 = sand.u32 %s364, 1
        %s597 = scalar_lea.sflag [#allocation6], %s596
        %s598 = sand.u32 %s364, 1
        %s599 = smul.addr %s598, 16
        %s600 = scalar_lea.vmem [#allocation12], %s599
        %p601 = pneg %p405
        %p602 = pneg %p402
        %s603 = sand.u32 %s392, 1
        %s604 = scalar_lea.sflag [#allocation14], %s603
        %s605 = sand.u32 %s392, 1
        %s606 = smul.addr %s605, 16
        %s607 = scalar_lea.vmem [#allocation13], %s606
        %s608 = smul.u32 2, %s41
        %p609 = scmp.lt.s32.totalorder %s40, 1
        %s610 = scalar_select %p609, %s40, 1
        %p611 = scmp.lt.s32.totalorder %s608, 1
        %s612 = scalar_select %p611, %s608, 1
        %s613 = smul.addr %s610, 2
        %s614 = sadd.s32 %s612, %s613
        %s615 = smul.addr %s614, 4
        %s616 = scalar_lea.vmem %s0, %s615
        %s617 = smul.u32 2, %s41
        %p618 = scmp.lt.s32.totalorder %s40, 1
        %s619 = scalar_select %p618, %s40, 1
        %s620 = smul.addr %s619, 2
        %s621 = smul.addr %s620, 4
        %s622 = scalar_lea.vmem %s1, %s621
        %s623 = smul.u32 2, %s41
        %s624 = smul.u32 2, %s41
        %v626 = vld [vmem:[%s616] sm:$0xf]
        %v627 = vld [vmem:[%s616 + $0x4] sm:$0xf]
        %p628 = scmp.eq.s32.totalorder %s41, 0
        // Predicated region
        $region93: #{tpu_custom_call.1} parent=75 // pred_check
          %p629 = pneg %p628
        $region94: #{tpu_custom_call.1} parent=75 // pred_check_branch
          %631 = sbr.rel (%p629) target = $region96
        $region95: #{tpu_custom_call.1} parent=75 // pred_region
          %v632 = vld [vmem:[%s622] sm:$0xf]
          %v633 = vld [vmem:[%s622 + $0x4] sm:$0xf]
          %v634 = vld [vmem:[#allocation4] sm:$0xf]
          %v635 = vld [vmem:[#allocation4 + $0x4] sm:$0xf]
          %v636 = vld [vmem:[#allocation4 + $0x8] sm:$0xf]
          %v637 = vld [vmem:[#allocation4 + $0xc] sm:$0xf]
          %v640 = vunpack.c.l.b16 %v632
          %v641 = vunpack.c.l.b16 %v633
          %v642 = vpack.c.b16 %v641, %v640
          %v647 = vunpack.c.l.b16 %v634
          %v648 = vunpack.c.l.b16 %v635
          %v649 = vunpack.c.l.b16 %v636
          %v650 = vunpack.c.l.b16 %v637
          %v651 = vpack.c.b16 %v648, %v647
          %v652 = vpack.c.b16 %v650, %v649
          %vm655 = vcmask 261120
          %v657 = vsel %vm655, %v642, 0
          %659 = vmatpush.bf16.msra.mxu0 0
          %660 = vmatpush.bf16.msra.mxu0 0
          %661 = vmatpush.bf16.msra.mxu0 0
          %662 = vmatpush.bf16.msra.mxu0 0
          %663 = vmatpush.bf16.msra.mxu0 0
          %664 = vmatpush.bf16.msra.mxu0 0
          %665 = vmatpush.bf16.msra.mxu0 %v652
          %666 = vmatpush.bf16.msra.mxu0 %v651
          %667 = vmatmul.bf16.gmra.mxu0 %v657
          %v668 = vpop.f32.mrf.mxu0
          %v669 = vadd.f32 0.0, %v668
          %v670 = vpop.f32.mrf.mxu0
          %v671 = vadd.f32 0.0, %v670
          %672 = vdwg.mxu0
          %v673 = vld [vmem:[#allocation7] sm:$0xf]
          %v674 = vld [vmem:[#allocation7 + $0x4] sm:$0xf]
          %v675 = vld [vmem:[#allocation7 + $0x8] sm:$0xf]
          %v676 = vld [vmem:[#allocation7 + $0xc] sm:$0xf]
          %v681 = vunpack.c.l.b16 %v673
          %v682 = vunpack.c.l.b16 %v674
          %v683 = vunpack.c.l.b16 %v675
          %v684 = vunpack.c.l.b16 %v676
          %v685 = vpack.c.b16 %v682, %v681
          %v686 = vpack.c.b16 %v684, %v683
          %689 = vmatpush.bf16.msra.mxu0 0
          %690 = vmatpush.bf16.msra.mxu0 0
          %691 = vmatpush.bf16.msra.mxu0 0
          %692 = vmatpush.bf16.msra.mxu0 0
          %693 = vmatpush.bf16.msra.mxu0 0
          %694 = vmatpush.bf16.msra.mxu0 0
          %695 = vmatpush.bf16.msra.mxu0 %v686
          %696 = vmatpush.bf16.msra.mxu0 %v685
          %697 = vmatmul.bf16.gmra.mxu0 %v657
          %v698 = vpop.f32.mrf.mxu0
          %v699 = vadd.f32 0.0, %v698
          %v700 = vpop.f32.mrf.mxu0
          %v701 = vadd.f32 0.0, %v700
          %702 = vdwg.mxu0
          %705 = vrot.lane.b32.xlu0 %v669, 112
          %v706 = vpop.permute.xlu0 %705
          %707 = vrot.lane.b32.xlu0 %v671, 112
          %v708 = vpop.permute.xlu0 %707
          %v711 = vrot.slane %v669, 4
          %vm712 = vcmask 1047556
          %v713 = vsel %vm712, 0.0, %v711
          %v715 = vunpack.c.l.s4 1983009808
          %v716 = vunpack.c.0.s8 %v715
          %v717 = vperm.slane %v669, %v716
          %v719 = vunpack.c.l.s4 1983009808
          %v720 = vunpack.c.0.s8 %v719
          %v721 = vperm.slane %v713, %v720
          %v722 = vrot.slane %v706, 4
          %v723 = vsel %vm712, 0.0, %v722
          %v725 = vunpack.c.l.s4 1983009808
          %v726 = vunpack.c.0.s8 %v725
          %v727 = vperm.slane %v706, %v726
          %v729 = vunpack.c.l.s4 1983009808
          %v730 = vunpack.c.0.s8 %v729
          %v731 = vperm.slane %v723, %v730
          %v732 = vrot.slane %v727, 4
          %v733 = vsel %vm712, %v732, %v717
          %v734 = vrot.slane %v717, 4
          %v735 = vsel %vm712, %v727, %v734
          %v737 = vunpack.c.l.s4 1934713408
          %v738 = vunpack.c.0.s8 %v737
          %v739 = vperm.slane %v733, %v738
          %v741 = vunpack.c.l.s4 1934713408
          %v742 = vunpack.c.0.s8 %v741
          %v743 = vperm.slane %v735, %v742
          %v744 = vrot.slane %v731, 4
          %v745 = vsel %vm712, %v744, %v721
          %v746 = vrot.slane %v721, 4
          %v747 = vsel %vm712, %v731, %v746
          %v749 = vunpack.c.l.s4 1934713408
          %v750 = vunpack.c.0.s8 %v749
          %v751 = vperm.slane %v745, %v750
          %v753 = vunpack.c.l.s4 1934713408
          %v754 = vunpack.c.0.s8 %v753
          %v755 = vperm.slane %v747, %v754
          %v756 = vrot.slane %v739, 4
          %v757 = vsel %vm712, 0.0, %v756
          %v758 = vrot.slane %v743, 4
          %v759 = vsel %vm712, 0.0, %v758
          %v760 = vrot.slane %v751, 4
          %v761 = vsel %vm712, 0.0, %v760
          %v762 = vrot.slane %v755, 4
          %v763 = vsel %vm712, 0.0, %v762
          %v764 = vrot.slane %v671, 4
          %v765 = vsel %vm712, 0.0, %v764
          %v767 = vunpack.c.l.s4 1983009808
          %v768 = vunpack.c.0.s8 %v767
          %v769 = vperm.slane %v671, %v768
          %v771 = vunpack.c.l.s4 1983009808
          %v772 = vunpack.c.0.s8 %v771
          %v773 = vperm.slane %v765, %v772
          %v774 = vrot.slane %v708, 4
          %v775 = vsel %vm712, 0.0, %v774
          %v777 = vunpack.c.l.s4 1983009808
          %v778 = vunpack.c.0.s8 %v777
          %v779 = vperm.slane %v708, %v778
          %v781 = vunpack.c.l.s4 1983009808
          %v782 = vunpack.c.0.s8 %v781
          %v783 = vperm.slane %v775, %v782
          %v784 = vrot.slane %v779, 4
          %v785 = vsel %vm712, %v784, %v769
          %v786 = vrot.slane %v769, 4
          %v787 = vsel %vm712, %v779, %v786
          %v789 = vunpack.c.l.s4 1934713408
          %v790 = vunpack.c.0.s8 %v789
          %v791 = vperm.slane %v785, %v790
          %v793 = vunpack.c.l.s4 1934713408
          %v794 = vunpack.c.0.s8 %v793
          %v795 = vperm.slane %v787, %v794
          %v796 = vrot.slane %v783, 4
          %v797 = vsel %vm712, %v796, %v773
          %v798 = vrot.slane %v773, 4
          %v799 = vsel %vm712, %v783, %v798
          %v801 = vunpack.c.l.s4 1934713408
          %v802 = vunpack.c.0.s8 %v801
          %v803 = vperm.slane %v797, %v802
          %v805 = vunpack.c.l.s4 1934713408
          %v806 = vunpack.c.0.s8 %v805
          %v807 = vperm.slane %v799, %v806
          %v808 = vrot.slane %v791, 4
          %v809 = vsel %vm712, 0.0, %v808
          %v810 = vrot.slane %v795, 4
          %v811 = vsel %vm712, 0.0, %v810
          %v812 = vrot.slane %v803, 4
          %v813 = vsel %vm712, 0.0, %v812
          %v814 = vrot.slane %v807, 4
          %v815 = vsel %vm712, 0.0, %v814
          %v816 = vsel %vm712, %v758, %v739
          %v818 = vunpack.c.l.s4 1983009808
          %v819 = vunpack.c.0.s8 %v818
          %v820 = vperm.slane %v816, %v819
          %v821 = vrot.slane %v759, 4
          %v822 = vsel %vm712, %v821, %v757
          %v824 = vunpack.c.l.s4 1983009808
          %v825 = vunpack.c.0.s8 %v824
          %v826 = vperm.slane %v822, %v825
          %v827 = vsel %vm712, %v762, %v751
          %v829 = vunpack.c.l.s4 1983009808
          %v830 = vunpack.c.0.s8 %v829
          %v831 = vperm.slane %v827, %v830
          %v832 = vrot.slane %v763, 4
          %v833 = vsel %vm712, %v832, %v761
          %v835 = vunpack.c.l.s4 1983009808
          %v836 = vunpack.c.0.s8 %v835
          %v837 = vperm.slane %v833, %v836
          %v838 = vrot.slane %v826, 4
          %v839 = vsel %vm712, %v838, %v820
          %v841 = vunpack.c.l.s4 1934713408
          %v842 = vunpack.c.0.s8 %v841
          %v843 = vperm.slane %v839, %v842
          %v844 = vrot.slane %v837, 4
          %v845 = vsel %vm712, %v844, %v831
          %v847 = vunpack.c.l.s4 1934713408
          %v848 = vunpack.c.0.s8 %v847
          %v849 = vperm.slane %v845, %v848
          %v850 = vrot.slane %v849, 4
          %v851 = vsel %vm712, %v850, %v843
          %v852 = vrot.slane %v843, 4
          %v853 = vsel %vm712, %v849, %v852
          %v854 = vsel %vm712, %v810, %v791
          %v856 = vunpack.c.l.s4 1983009808
          %v857 = vunpack.c.0.s8 %v856
          %v858 = vperm.slane %v854, %v857
          %v859 = vrot.slane %v811, 4
          %v860 = vsel %vm712, %v859, %v809
          %v862 = vunpack.c.l.s4 1983009808
          %v863 = vunpack.c.0.s8 %v862
          %v864 = vperm.slane %v860, %v863
          %v865 = vsel %vm712, %v814, %v803
          %v867 = vunpack.c.l.s4 1983009808
          %v868 = vunpack.c.0.s8 %v867
          %v869 = vperm.slane %v865, %v868
          %v870 = vrot.slane %v815, 4
          %v871 = vsel %vm712, %v870, %v813
          %v873 = vunpack.c.l.s4 1983009808
          %v874 = vunpack.c.0.s8 %v873
          %v875 = vperm.slane %v871, %v874
          %v876 = vrot.slane %v864, 4
          %v877 = vsel %vm712, %v876, %v858
          %v879 = vunpack.c.l.s4 1934713408
          %v880 = vunpack.c.0.s8 %v879
          %v881 = vperm.slane %v877, %v880
          %v882 = vrot.slane %v875, 4
          %v883 = vsel %vm712, %v882, %v869
          %v885 = vunpack.c.l.s4 1934713408
          %v886 = vunpack.c.0.s8 %v885
          %v887 = vperm.slane %v883, %v886
          %v888 = vrot.slane %v887, 4
          %v889 = vsel %vm712, %v888, %v881
          %v890 = vrot.slane %v881, 4
          %v891 = vsel %vm712, %v887, %v890
          %v892 = vpack.c.bf16 %v851, %v851
          %v893 = vpack.c.bf16 %v889, %v889
          %v894 = vpack.c.bf16 %v853, %v853
          %v895 = vpack.c.bf16 %v891, %v891
          %vm896 = vcmask 125952
          %897 = vst.msk [vmem:[#allocation2] sm:$0xf] %vm896, %v892
          %898 = vst.msk [vmem:[#allocation2 + $0x4] sm:$0xf] %vm896, %v893
          %899 = vst.msk [vmem:[#allocation2 + $0x8] sm:$0xf] %vm896, %v894
          %900 = vst.msk [vmem:[#allocation2 + $0xc] sm:$0xf] %vm896, %v895
          %903 = vrot.lane.b32.xlu0 %v699, 112
          %v904 = vpop.permute.xlu0 %903
          %905 = vrot.lane.b32.xlu0 %v701, 112
          %v906 = vpop.permute.xlu0 %905
          %v909 = vrot.slane %v699, 4
          %v910 = vsel %vm712, 0.0, %v909
          %v912 = vunpack.c.l.s4 1983009808
          %v913 = vunpack.c.0.s8 %v912
          %v914 = vperm.slane %v699, %v913
          %v916 = vunpack.c.l.s4 1983009808
          %v917 = vunpack.c.0.s8 %v916
          %v918 = vperm.slane %v910, %v917
          %v919 = vrot.slane %v904, 4
          %v920 = vsel %vm712, 0.0, %v919
          %v922 = vunpack.c.l.s4 1983009808
          %v923 = vunpack.c.0.s8 %v922
          %v924 = vperm.slane %v904, %v923
          %v926 = vunpack.c.l.s4 1983009808
          %v927 = vunpack.c.0.s8 %v926
          %v928 = vperm.slane %v920, %v927
          %v929 = vrot.slane %v924, 4
          %v930 = vsel %vm712, %v929, %v914
          %v931 = vrot.slane %v914, 4
          %v932 = vsel %vm712, %v924, %v931
          %v934 = vunpack.c.l.s4 1934713408
          %v935 = vunpack.c.0.s8 %v934
          %v936 = vperm.slane %v930, %v935
          %v938 = vunpack.c.l.s4 1934713408
          %v939 = vunpack.c.0.s8 %v938
          %v940 = vperm.slane %v932, %v939
          %v941 = vrot.slane %v928, 4
          %v942 = vsel %vm712, %v941, %v918
          %v943 = vrot.slane %v918, 4
          %v944 = vsel %vm712, %v928, %v943
          %v946 = vunpack.c.l.s4 1934713408
          %v947 = vunpack.c.0.s8 %v946
          %v948 = vperm.slane %v942, %v947
          %v950 = vunpack.c.l.s4 1934713408
          %v951 = vunpack.c.0.s8 %v950
          %v952 = vperm.slane %v944, %v951
          %v953 = vrot.slane %v936, 4
          %v954 = vsel %vm712, 0.0, %v953
          %v955 = vrot.slane %v940, 4
          %v956 = vsel %vm712, 0.0, %v955
          %v957 = vrot.slane %v948, 4
          %v958 = vsel %vm712, 0.0, %v957
          %v959 = vrot.slane %v952, 4
          %v960 = vsel %vm712, 0.0, %v959
          %v961 = vrot.slane %v701, 4
          %v962 = vsel %vm712, 0.0, %v961
          %v964 = vunpack.c.l.s4 1983009808
          %v965 = vunpack.c.0.s8 %v964
          %v966 = vperm.slane %v701, %v965
          %v968 = vunpack.c.l.s4 1983009808
          %v969 = vunpack.c.0.s8 %v968
          %v970 = vperm.slane %v962, %v969
          %v971 = vrot.slane %v906, 4
          %v972 = vsel %vm712, 0.0, %v971
          %v974 = vunpack.c.l.s4 1983009808
          %v975 = vunpack.c.0.s8 %v974
          %v976 = vperm.slane %v906, %v975
          %v978 = vunpack.c.l.s4 1983009808
          %v979 = vunpack.c.0.s8 %v978
          %v980 = vperm.slane %v972, %v979
          %v981 = vrot.slane %v976, 4
          %v982 = vsel %vm712, %v981, %v966
          %v983 = vrot.slane %v966, 4
          %v984 = vsel %vm712, %v976, %v983
          %v986 = vunpack.c.l.s4 1934713408
          %v987 = vunpack.c.0.s8 %v986
          %v988 = vperm.slane %v982, %v987
          %v990 = vunpack.c.l.s4 1934713408
          %v991 = vunpack.c.0.s8 %v990
          %v992 = vperm.slane %v984, %v991
          %v993 = vrot.slane %v980, 4
          %v994 = vsel %vm712, %v993, %v970
          %v995 = vrot.slane %v970, 4
          %v996 = vsel %vm712, %v980, %v995
          %v998 = vunpack.c.l.s4 1934713408
          %v999 = vunpack.c.0.s8 %v998
          %v1000 = vperm.slane %v994, %v999
          %v1002 = vunpack.c.l.s4 1934713408
          %v1003 = vunpack.c.0.s8 %v1002
          %v1004 = vperm.slane %v996, %v1003
          %v1005 = vrot.slane %v988, 4
          %v1006 = vsel %vm712, 0.0, %v1005
          %v1007 = vrot.slane %v992, 4
          %v1008 = vsel %vm712, 0.0, %v1007
          %v1009 = vrot.slane %v1000, 4
          %v1010 = vsel %vm712, 0.0, %v1009
          %v1011 = vrot.slane %v1004, 4
          %v1012 = vsel %vm712, 0.0, %v1011
          %v1013 = vsel %vm712, %v955, %v936
          %v1015 = vunpack.c.l.s4 1983009808
          %v1016 = vunpack.c.0.s8 %v1015
          %v1017 = vperm.slane %v1013, %v1016
          %v1018 = vrot.slane %v956, 4
          %v1019 = vsel %vm712, %v1018, %v954
          %v1021 = vunpack.c.l.s4 1983009808
          %v1022 = vunpack.c.0.s8 %v1021
          %v1023 = vperm.slane %v1019, %v1022
          %v1024 = vsel %vm712, %v959, %v948
          %v1026 = vunpack.c.l.s4 1983009808
          %v1027 = vunpack.c.0.s8 %v1026
          %v1028 = vperm.slane %v1024, %v1027
          %v1029 = vrot.slane %v960, 4
          %v1030 = vsel %vm712, %v1029, %v958
          %v1032 = vunpack.c.l.s4 1983009808
          %v1033 = vunpack.c.0.s8 %v1032
          %v1034 = vperm.slane %v1030, %v1033
          %v1035 = vrot.slane %v1023, 4
          %v1036 = vsel %vm712, %v1035, %v1017
          %v1038 = vunpack.c.l.s4 1934713408
          %v1039 = vunpack.c.0.s8 %v1038
          %v1040 = vperm.slane %v1036, %v1039
          %v1041 = vrot.slane %v1034, 4
          %v1042 = vsel %vm712, %v1041, %v1028
          %v1044 = vunpack.c.l.s4 1934713408
          %v1045 = vunpack.c.0.s8 %v1044
          %v1046 = vperm.slane %v1042, %v1045
          %v1047 = vrot.slane %v1046, 4
          %v1048 = vsel %vm712, %v1047, %v1040
          %v1049 = vrot.slane %v1040, 4
          %v1050 = vsel %vm712, %v1046, %v1049
          %v1051 = vsel %vm712, %v1007, %v988
          %v1053 = vunpack.c.l.s4 1983009808
          %v1054 = vunpack.c.0.s8 %v1053
          %v1055 = vperm.slane %v1051, %v1054
          %v1056 = vrot.slane %v1008, 4
          %v1057 = vsel %vm712, %v1056, %v1006
          %v1059 = vunpack.c.l.s4 1983009808
          %v1060 = vunpack.c.0.s8 %v1059
          %v1061 = vperm.slane %v1057, %v1060
          %v1062 = vsel %vm712, %v1011, %v1000
          %v1064 = vunpack.c.l.s4 1983009808
          %v1065 = vunpack.c.0.s8 %v1064
          %v1066 = vperm.slane %v1062, %v1065
          %v1067 = vrot.slane %v1012, 4
          %v1068 = vsel %vm712, %v1067, %v1010
          %v1070 = vunpack.c.l.s4 1983009808
          %v1071 = vunpack.c.0.s8 %v1070
          %v1072 = vperm.slane %v1068, %v1071
          %v1073 = vrot.slane %v1061, 4
          %v1074 = vsel %vm712, %v1073, %v1055
          %v1076 = vunpack.c.l.s4 1934713408
          %v1077 = vunpack.c.0.s8 %v1076
          %v1078 = vperm.slane %v1074, %v1077
          %v1079 = vrot.slane %v1072, 4
          %v1080 = vsel %vm712, %v1079, %v1066
          %v1082 = vunpack.c.l.s4 1934713408
          %v1083 = vunpack.c.0.s8 %v1082
          %v1084 = vperm.slane %v1080, %v1083
          %v1085 = vrot.slane %v1084, 4
          %v1086 = vsel %vm712, %v1085, %v1078
          %v1087 = vrot.slane %v1078, 4
          %v1088 = vsel %vm712, %v1084, %v1087
          %v1089 = vpack.c.bf16 %v1048, %v1048
          %v1090 = vpack.c.bf16 %v1086, %v1086
          %v1091 = vpack.c.bf16 %v1050, %v1050
          %v1092 = vpack.c.bf16 %v1088, %v1088
          %1093 = vst.msk [vmem:[#allocation3] sm:$0xf] %vm896, %v1089
          %1094 = vst.msk [vmem:[#allocation3 + $0x4] sm:$0xf] %vm896, %v1090
          %1095 = vst.msk [vmem:[#allocation3 + $0x8] sm:$0xf] %vm896, %v1091
          %1096 = vst.msk [vmem:[#allocation3 + $0xc] sm:$0xf] %vm896, %v1092
        $region96: #{tpu_custom_call.1} parent=75 // pred_fallthru
          _
        %v1097 = vld [vmem:[%s2] sm:$0xf]
        %v1098 = vld [vmem:[%s2 + $0x4] sm:$0xf]
        %v1099 = vld [vmem:[%s2 + $0x8] sm:$0xf]
        %v1100 = vld [vmem:[%s2 + $0xc] sm:$0xf]
        %v1103 = vunpack.c.l.b16 %v626
        %v1104 = vunpack.c.l.b16 %v627
        %v1105 = vpack.c.b16 %v1104, %v1103
        %v1110 = vunpack.c.l.b16 %v1097
        %v1111 = vunpack.c.l.b16 %v1098
        %v1112 = vunpack.c.l.b16 %v1099
        %v1113 = vunpack.c.l.b16 %v1100
        %v1114 = vpack.c.b16 %v1111, %v1110
        %v1115 = vpack.c.b16 %v1113, %v1112
        %vm1118 = vcmask 261120
        %v1120 = vsel %vm1118, %v1105, 0
        %1122 = vmatpush.bf16.msra.mxu0 0
        %1123 = vmatpush.bf16.msra.mxu0 0
        %1124 = vmatpush.bf16.msra.mxu0 0
        %1125 = vmatpush.bf16.msra.mxu0 0
        %1126 = vmatpush.bf16.msra.mxu0 0
        %1127 = vmatpush.bf16.msra.mxu0 0
        %1128 = vmatpush.bf16.msra.mxu0 %v1115
        %1129 = vmatpush.bf16.msra.mxu0 %v1114
        %1130 = vmatmul.bf16.gmra.mxu0 %v1120
        %v1131 = vpop.f32.mrf.mxu0
        %v1132 = vadd.f32 0.0, %v1131
        %v1133 = vpop.f32.mrf.mxu0
        %v1134 = vadd.f32 0.0, %v1133
        %1135 = vdwg.mxu0
        %v1136 = vmul.f32 %v1132, 0.25
        %v1137 = vmul.f32 %v1134, 0.25
        %1140 = vrot.lane.b32.xlu0 %v1136, 112
        %v1141 = vpop.permute.xlu0 %1140
        %1142 = vrot.lane.b32.xlu0 %v1137, 112
        %v1143 = vpop.permute.xlu0 %1142
        %v1146 = vrot.slane %v1136, 4
        %vm1147 = vcmask 1047556
        %v1148 = vsel %vm1147, 0.0, %v1146
        %v1150 = vunpack.c.l.s4 1983009808
        %v1151 = vunpack.c.0.s8 %v1150
        %v1152 = vperm.slane %v1136, %v1151
        %v1154 = vunpack.c.l.s4 1983009808
        %v1155 = vunpack.c.0.s8 %v1154
        %v1156 = vperm.slane %v1148, %v1155
        %v1157 = vrot.slane %v1141, 4
        %v1158 = vsel %vm1147, 0.0, %v1157
        %v1160 = vunpack.c.l.s4 1983009808
        %v1161 = vunpack.c.0.s8 %v1160
        %v1162 = vperm.slane %v1141, %v1161
        %v1164 = vunpack.c.l.s4 1983009808
        %v1165 = vunpack.c.0.s8 %v1164
        %v1166 = vperm.slane %v1158, %v1165
        %v1167 = vrot.slane %v1162, 4
        %v1168 = vsel %vm1147, %v1167, %v1152
        %v1169 = vrot.slane %v1152, 4
        %v1170 = vsel %vm1147, %v1162, %v1169
        %v1172 = vunpack.c.l.s4 1934713408
        %v1173 = vunpack.c.0.s8 %v1172
        %v1174 = vperm.slane %v1168, %v1173
        %v1176 = vunpack.c.l.s4 1934713408
        %v1177 = vunpack.c.0.s8 %v1176
        %v1178 = vperm.slane %v1170, %v1177
        %v1179 = vrot.slane %v1166, 4
        %v1180 = vsel %vm1147, %v1179, %v1156
        %v1181 = vrot.slane %v1156, 4
        %v1182 = vsel %vm1147, %v1166, %v1181
        %v1184 = vunpack.c.l.s4 1934713408
        %v1185 = vunpack.c.0.s8 %v1184
        %v1186 = vperm.slane %v1180, %v1185
        %v1188 = vunpack.c.l.s4 1934713408
        %v1189 = vunpack.c.0.s8 %v1188
        %v1190 = vperm.slane %v1182, %v1189
        %v1191 = vrot.slane %v1174, 4
        %v1192 = vsel %vm1147, 0.0, %v1191
        %v1193 = vrot.slane %v1178, 4
        %v1194 = vsel %vm1147, 0.0, %v1193
        %v1195 = vrot.slane %v1186, 4
        %v1196 = vsel %vm1147, 0.0, %v1195
        %v1197 = vrot.slane %v1190, 4
        %v1198 = vsel %vm1147, 0.0, %v1197
        %v1199 = vrot.slane %v1137, 4
        %v1200 = vsel %vm1147, 0.0, %v1199
        %v1202 = vunpack.c.l.s4 1983009808
        %v1203 = vunpack.c.0.s8 %v1202
        %v1204 = vperm.slane %v1137, %v1203
        %v1206 = vunpack.c.l.s4 1983009808
        %v1207 = vunpack.c.0.s8 %v1206
        %v1208 = vperm.slane %v1200, %v1207
        %v1209 = vrot.slane %v1143, 4
        %v1210 = vsel %vm1147, 0.0, %v1209
        %v1212 = vunpack.c.l.s4 1983009808
        %v1213 = vunpack.c.0.s8 %v1212
        %v1214 = vperm.slane %v1143, %v1213
        %v1216 = vunpack.c.l.s4 1983009808
        %v1217 = vunpack.c.0.s8 %v1216
        %v1218 = vperm.slane %v1210, %v1217
        %v1219 = vrot.slane %v1214, 4
        %v1220 = vsel %vm1147, %v1219, %v1204
        %v1221 = vrot.slane %v1204, 4
        %v1222 = vsel %vm1147, %v1214, %v1221
        %v1224 = vunpack.c.l.s4 1934713408
        %v1225 = vunpack.c.0.s8 %v1224
        %v1226 = vperm.slane %v1220, %v1225
        %v1228 = vunpack.c.l.s4 1934713408
        %v1229 = vunpack.c.0.s8 %v1228
        %v1230 = vperm.slane %v1222, %v1229
        %v1231 = vrot.slane %v1218, 4
        %v1232 = vsel %vm1147, %v1231, %v1208
        %v1233 = vrot.slane %v1208, 4
        %v1234 = vsel %vm1147, %v1218, %v1233
        %v1236 = vunpack.c.l.s4 1934713408
        %v1237 = vunpack.c.0.s8 %v1236
        %v1238 = vperm.slane %v1232, %v1237
        %v1240 = vunpack.c.l.s4 1934713408
        %v1241 = vunpack.c.0.s8 %v1240
        %v1242 = vperm.slane %v1234, %v1241
        %v1243 = vrot.slane %v1226, 4
        %v1244 = vsel %vm1147, 0.0, %v1243
        %v1245 = vrot.slane %v1230, 4
        %v1246 = vsel %vm1147, 0.0, %v1245
        %v1247 = vrot.slane %v1238, 4
        %v1248 = vsel %vm1147, 0.0, %v1247
        %v1249 = vrot.slane %v1242, 4
        %v1250 = vsel %vm1147, 0.0, %v1249
        %v1251 = vsel %vm1147, %v1193, %v1174
        %v1253 = vunpack.c.l.s4 1983009808
        %v1254 = vunpack.c.0.s8 %v1253
        %v1255 = vperm.slane %v1251, %v1254
        %v1256 = vrot.slane %v1194, 4
        %v1257 = vsel %vm1147, %v1256, %v1192
        %v1259 = vunpack.c.l.s4 1983009808
        %v1260 = vunpack.c.0.s8 %v1259
        %v1261 = vperm.slane %v1257, %v1260
        %v1262 = vsel %vm1147, %v1197, %v1186
        %v1264 = vunpack.c.l.s4 1983009808
        %v1265 = vunpack.c.0.s8 %v1264
        %v1266 = vperm.slane %v1262, %v1265
        %v1267 = vrot.slane %v1198, 4
        %v1268 = vsel %vm1147, %v1267, %v1196
        %v1270 = vunpack.c.l.s4 1983009808
        %v1271 = vunpack.c.0.s8 %v1270
        %v1272 = vperm.slane %v1268, %v1271
        %v1273 = vrot.slane %v1261, 4
        %v1274 = vsel %vm1147, %v1273, %v1255
        %v1276 = vunpack.c.l.s4 1934713408
        %v1277 = vunpack.c.0.s8 %v1276
        %v1278 = vperm.slane %v1274, %v1277
        %v1279 = vrot.slane %v1272, 4
        %v1280 = vsel %vm1147, %v1279, %v1266
        %v1282 = vunpack.c.l.s4 1934713408
        %v1283 = vunpack.c.0.s8 %v1282
        %v1284 = vperm.slane %v1280, %v1283
        %v1285 = vrot.slane %v1284, 4
        %v1286 = vsel %vm1147, %v1285, %v1278
        %v1287 = vrot.slane %v1278, 4
        %v1288 = vsel %vm1147, %v1284, %v1287
        %v1289 = vsel %vm1147, %v1245, %v1226
        %v1291 = vunpack.c.l.s4 1983009808
        %v1292 = vunpack.c.0.s8 %v1291
        %v1293 = vperm.slane %v1289, %v1292
        %v1294 = vrot.slane %v1246, 4
        %v1295 = vsel %vm1147, %v1294, %v1244
        %v1297 = vunpack.c.l.s4 1983009808
        %v1298 = vunpack.c.0.s8 %v1297
        %v1299 = vperm.slane %v1295, %v1298
        %v1300 = vsel %vm1147, %v1249, %v1238
        %v1302 = vunpack.c.l.s4 1983009808
        %v1303 = vunpack.c.0.s8 %v1302
        %v1304 = vperm.slane %v1300, %v1303
        %v1305 = vrot.slane %v1250, 4
        %v1306 = vsel %vm1147, %v1305, %v1248
        %v1308 = vunpack.c.l.s4 1983009808
        %v1309 = vunpack.c.0.s8 %v1308
        %v1310 = vperm.slane %v1306, %v1309
        %v1311 = vrot.slane %v1299, 4
        %v1312 = vsel %vm1147, %v1311, %v1293
        %v1314 = vunpack.c.l.s4 1934713408
        %v1315 = vunpack.c.0.s8 %v1314
        %v1316 = vperm.slane %v1312, %v1315
        %v1317 = vrot.slane %v1310, 4
        %v1318 = vsel %vm1147, %v1317, %v1304
        %v1320 = vunpack.c.l.s4 1934713408
        %v1321 = vunpack.c.0.s8 %v1320
        %v1322 = vperm.slane %v1318, %v1321
        %v1323 = vrot.slane %v1322, 4
        %v1324 = vsel %vm1147, %v1323, %v1316
        %v1325 = vrot.slane %v1316, 4
        %v1326 = vsel %vm1147, %v1322, %v1325
        %v1327 = vpack.c.bf16 %v1286, %v1286
        %v1328 = vpack.c.bf16 %v1324, %v1324
        %v1329 = vpack.c.bf16 %v1288, %v1288
        %v1330 = vpack.c.bf16 %v1326, %v1326
        %v1331 = vld [vmem:[#allocation2] sm:$0xf]
        %v1332 = vld [vmem:[#allocation2 + $0x4] sm:$0xf]
        %v1333 = vld [vmem:[#allocation2 + $0x8] sm:$0xf]
        %v1334 = vld [vmem:[#allocation2 + $0xc] sm:$0xf]
        %v1335 = vld [vmem:[#allocation3] sm:$0xf]
        %v1336 = vld [vmem:[#allocation3 + $0x4] sm:$0xf]
        %v1337 = vld [vmem:[#allocation3 + $0x8] sm:$0xf]
        %v1338 = vld [vmem:[#allocation3 + $0xc] sm:$0xf]
        %v1341 = vunpack.c.l.b16 %v1327
        %v1342 = vunpack.c.l.b16 %v1328
        %v1343 = vpack.c.b16 %v1342, %v1341
        %v1346 = vunpack.c.l.b16 %v1331
        %v1347 = vunpack.c.l.b16 %v1332
        %v1348 = vpack.c.b16 %v1347, %v1346
        %vm1349 = vcmask 130048
        %v1351 = vsel %vm1349, %v1343, 0
        %v1354 = vsel %vm1349, %v1348, 0
        %1356 = vmatpush.bf16.xpose.msra.mxu0 0
        %1357 = vmatpush.bf16.xpose.msra.mxu0 0
        %1358 = vmatpush.bf16.xpose.msra.mxu0 0
        %1359 = vmatpush.bf16.xpose.msra.mxu0 0
        %1360 = vmatpush.bf16.xpose.msra.mxu0 0
        %1361 = vmatpush.bf16.xpose.msra.mxu0 0
        %1362 = vmatpush.bf16.xpose.msra.mxu0 0
        %1363 = vmatpush.bf16.xpose.msra.mxu0 %v1354
        %1364 = vmatmul.bf16.gmra.mxu0 %v1351
        %v1365 = vpop.f32.mrf.mxu0
        %v1366 = vadd.f32 0.0, %v1365
        %v1367 = vpop.f32.mrf.mxu0
        %v1368 = vadd.f32 0.0, %v1367
        %1369 = vdwg.mxu0
        %v1372 = vunpack.c.l.b16 %v1329
        %v1373 = vunpack.c.l.b16 %v1330
        %v1374 = vpack.c.b16 %v1373, %v1372
        %v1377 = vunpack.c.l.b16 %v1333
        %v1378 = vunpack.c.l.b16 %v1334
        %v1379 = vpack.c.b16 %v1378, %v1377
        %v1381 = vsel %vm1349, %v1374, 0
        %v1384 = vsel %vm1349, %v1379, 0
        %1386 = vmatpush.bf16.xpose.msra.mxu0 0
        %1387 = vmatpush.bf16.xpose.msra.mxu0 0
        %1388 = vmatpush.bf16.xpose.msra.mxu0 0
        %1389 = vmatpush.bf16.xpose.msra.mxu0 0
        %1390 = vmatpush.bf16.xpose.msra.mxu0 0
        %1391 = vmatpush.bf16.xpose.msra.mxu0 0
        %1392 = vmatpush.bf16.xpose.msra.mxu0 0
        %1393 = vmatpush.bf16.xpose.msra.mxu0 %v1384
        %1394 = vmatmul.bf16.gmra.mxu0 %v1381
        %v1395 = vpop.f32.mrf.mxu0
        %v1396 = vadd.f32 0.0, %v1395
        %v1397 = vpop.f32.mrf.mxu0
        %v1398 = vadd.f32 0.0, %v1397
        %1399 = vdwg.mxu0
        %v1400 = vsel %vm1349, %v1366, -inf
        %1401 = vmax.xlane.f32.xlu0 %v1400
        %v1402 = vpop.xlane.xlu0 %1401
        %v1403 = vsel %vm1349, %v1368, -inf
        %1404 = vmax.xlane.f32.xlu0 %v1403
        %v1405 = vpop.xlane.xlu0 %1404
        %v1406 = vsel %vm1349, %v1396, -inf
        %1407 = vmax.xlane.f32.xlu0 %v1406
        %v1408 = vpop.xlane.xlu0 %1407
        %v1409 = vsel %vm1349, %v1398, -inf
        %1410 = vmax.xlane.f32.xlu0 %v1409
        %v1411 = vpop.xlane.xlu0 %1410
        %v1412 = vsub.f32 %v1366, %v1402
        %v1413 = vsub.f32 %v1368, %v1405
        %v1414 = vsub.f32 %v1396, %v1408
        %v1415 = vsub.f32 %v1398, %v1411
        %v1416 = vmul.f32 %v1412, 1.442695
        %v1417 = vpow.pop %v1416
        %v1418 = vmul.f32 %v1413, 1.442695
        %v1419 = vpow.pop %v1418
        %v1420 = vmul.f32 %v1414, 1.442695
        %v1421 = vpow.pop %v1420
        %v1422 = vmul.f32 %v1415, 1.442695
        %v1423 = vpow.pop %v1422
        %v1424 = vsel %vm1349, %v1417, 0.0
        %1425 = vadd.xlane.f32.xlu0 %v1424
        %v1426 = vpop.xlane.xlu0 %1425
        %v1427 = vsel %vm1349, %v1419, 0.0
        %1428 = vadd.xlane.f32.xlu0 %v1427
        %v1429 = vpop.xlane.xlu0 %1428
        %v1430 = vsel %vm1349, %v1421, 0.0
        %1431 = vadd.xlane.f32.xlu0 %v1430
        %v1432 = vpop.xlane.xlu0 %1431
        %v1433 = vsel %vm1349, %v1423, 0.0
        %1434 = vadd.xlane.f32.xlu0 %v1433
        %v1435 = vpop.xlane.xlu0 %1434
        %v1436 = vrcp.pop %v1426
        %v1437 = vrcp.pop %v1429
        %v1438 = vrcp.pop %v1432
        %v1439 = vrcp.pop %v1435
        %v1440 = vmul.f32 %v1417, %v1436
        %v1441 = vmul.f32 %v1419, %v1437
        %v1442 = vmul.f32 %v1421, %v1438
        %v1443 = vmul.f32 %v1423, %v1439
        %v1444 = vpack.c.bf16 %v1440, %v1440
        %v1445 = vpack.c.bf16 %v1441, %v1441
        %v1446 = vpack.c.bf16 %v1442, %v1442
        %v1447 = vpack.c.bf16 %v1443, %v1443
        %vm1448 = vcmask 125952
        %1449 = vst.msk [vmem:[%s607] sm:$0xf] %vm1448, %v1444
        %1450 = vst.msk [vmem:[%s607 + $0x4] sm:$0xf] %vm1448, %v1445
        %1451 = vst.msk [vmem:[%s607 + $0x8] sm:$0xf] %vm1448, %v1446
        %1452 = vst.msk [vmem:[%s607 + $0xc] sm:$0xf] %vm1448, %v1447
        %v1455 = vunpack.c.l.b16 %v1444
        %v1456 = vunpack.c.l.b16 %v1445
        %v1457 = vpack.c.b16 %v1456, %v1455
        %v1460 = vunpack.c.l.b16 %v1335
        %v1461 = vunpack.c.l.b16 %v1336
        %v1462 = vpack.c.b16 %v1461, %v1460
        %v1465 = vsel %vm1349, %v1457, 0
        %1467 = vmatpush.bf16.msra.mxu0 0
        %1468 = vmatpush.bf16.msra.mxu0 0
        %1469 = vmatpush.bf16.msra.mxu0 0
        %1470 = vmatpush.bf16.msra.mxu0 0
        %1471 = vmatpush.bf16.msra.mxu0 0
        %1472 = vmatpush.bf16.msra.mxu0 0
        %1473 = vmatpush.bf16.msra.mxu0 0
        %1474 = vmatpush.bf16.msra.mxu0 %v1462
        %1475 = vmatmul.bf16.gmra.mxu0 %v1465
        %v1476 = vpop.f32.mrf.mxu0
        %v1477 = vadd.f32 0.0, %v1476
        %v1478 = vpop.f32.mrf.mxu0
        %v1479 = vadd.f32 0.0, %v1478
        %1480 = vdwg.mxu0
        %v1483 = vunpack.c.l.b16 %v1446
        %v1484 = vunpack.c.l.b16 %v1447
        %v1485 = vpack.c.b16 %v1484, %v1483
        %v1488 = vunpack.c.l.b16 %v1337
        %v1489 = vunpack.c.l.b16 %v1338
        %v1490 = vpack.c.b16 %v1489, %v1488
        %v1493 = vsel %vm1349, %v1485, 0
        %1495 = vmatpush.bf16.msra.mxu0 0
        %1496 = vmatpush.bf16.msra.mxu0 0
        %1497 = vmatpush.bf16.msra.mxu0 0
        %1498 = vmatpush.bf16.msra.mxu0 0
        %1499 = vmatpush.bf16.msra.mxu0 0
        %1500 = vmatpush.bf16.msra.mxu0 0
        %1501 = vmatpush.bf16.msra.mxu0 0
        %1502 = vmatpush.bf16.msra.mxu0 %v1490
        %1503 = vmatmul.bf16.gmra.mxu0 %v1493
        %v1504 = vpop.f32.mrf.mxu0
        %v1505 = vadd.f32 0.0, %v1504
        %v1506 = vpop.f32.mrf.mxu0
        %v1507 = vadd.f32 0.0, %v1506
        %1508 = vdwg.mxu0
        %v1509 = vrot.slane %v1477, 4
        %v1510 = vsel %vm1147, 0.0, %v1509
        %v1512 = vunpack.c.l.s4 1983009808
        %v1513 = vunpack.c.0.s8 %v1512
        %v1514 = vperm.slane %v1477, %v1513
        %v1516 = vunpack.c.l.s4 1983009808
        %v1517 = vunpack.c.0.s8 %v1516
        %v1518 = vperm.slane %v1510, %v1517
        %v1519 = vrot.slane %v1505, 4
        %v1520 = vsel %vm1147, 0.0, %v1519
        %v1522 = vunpack.c.l.s4 1983009808
        %v1523 = vunpack.c.0.s8 %v1522
        %v1524 = vperm.slane %v1505, %v1523
        %v1526 = vunpack.c.l.s4 1983009808
        %v1527 = vunpack.c.0.s8 %v1526
        %v1528 = vperm.slane %v1520, %v1527
        %v1529 = vrot.slane %v1524, 4
        %v1530 = vsel %vm1147, %v1529, %v1514
        %v1531 = vrot.slane %v1514, 4
        %v1532 = vsel %vm1147, %v1524, %v1531
        %v1534 = vunpack.c.l.s4 1934713408
        %v1535 = vunpack.c.0.s8 %v1534
        %v1536 = vperm.slane %v1530, %v1535
        %v1538 = vunpack.c.l.s4 1934713408
        %v1539 = vunpack.c.0.s8 %v1538
        %v1540 = vperm.slane %v1532, %v1539
        %v1541 = vrot.slane %v1528, 4
        %v1542 = vsel %vm1147, %v1541, %v1518
        %v1543 = vrot.slane %v1518, 4
        %v1544 = vsel %vm1147, %v1528, %v1543
        %v1546 = vunpack.c.l.s4 1934713408
        %v1547 = vunpack.c.0.s8 %v1546
        %v1548 = vperm.slane %v1542, %v1547
        %v1550 = vunpack.c.l.s4 1934713408
        %v1551 = vunpack.c.0.s8 %v1550
        %v1552 = vperm.slane %v1544, %v1551
        %v1553 = vrot.slane %v1536, 4
        %v1554 = vsel %vm1147, 0.0, %v1553
        %v1555 = vrot.slane %v1540, 4
        %v1556 = vsel %vm1147, 0.0, %v1555
        %v1557 = vrot.slane %v1548, 4
        %v1558 = vsel %vm1147, 0.0, %v1557
        %v1559 = vrot.slane %v1552, 4
        %v1560 = vsel %vm1147, 0.0, %v1559
        %v1561 = vrot.slane %v1479, 4
        %v1562 = vsel %vm1147, 0.0, %v1561
        %v1564 = vunpack.c.l.s4 1983009808
        %v1565 = vunpack.c.0.s8 %v1564
        %v1566 = vperm.slane %v1479, %v1565
        %v1568 = vunpack.c.l.s4 1983009808
        %v1569 = vunpack.c.0.s8 %v1568
        %v1570 = vperm.slane %v1562, %v1569
        %v1571 = vrot.slane %v1507, 4
        %v1572 = vsel %vm1147, 0.0, %v1571
        %v1574 = vunpack.c.l.s4 1983009808
        %v1575 = vunpack.c.0.s8 %v1574
        %v1576 = vperm.slane %v1507, %v1575
        %v1578 = vunpack.c.l.s4 1983009808
        %v1579 = vunpack.c.0.s8 %v1578
        %v1580 = vperm.slane %v1572, %v1579
        %v1581 = vrot.slane %v1576, 4
        %v1582 = vsel %vm1147, %v1581, %v1566
        %v1583 = vrot.slane %v1566, 4
        %v1584 = vsel %vm1147, %v1576, %v1583
        %v1586 = vunpack.c.l.s4 1934713408
        %v1587 = vunpack.c.0.s8 %v1586
        %v1588 = vperm.slane %v1582, %v1587
        %v1590 = vunpack.c.l.s4 1934713408
        %v1591 = vunpack.c.0.s8 %v1590
        %v1592 = vperm.slane %v1584, %v1591
        %v1593 = vrot.slane %v1580, 4
        %v1594 = vsel %vm1147, %v1593, %v1570
        %v1595 = vrot.slane %v1570, 4
        %v1596 = vsel %vm1147, %v1580, %v1595
        %v1598 = vunpack.c.l.s4 1934713408
        %v1599 = vunpack.c.0.s8 %v1598
        %v1600 = vperm.slane %v1594, %v1599
        %v1602 = vunpack.c.l.s4 1934713408
        %v1603 = vunpack.c.0.s8 %v1602
        %v1604 = vperm.slane %v1596, %v1603
        %v1605 = vrot.slane %v1588, 4
        %v1606 = vsel %vm1147, 0.0, %v1605
        %v1607 = vrot.slane %v1592, 4
        %v1608 = vsel %vm1147, 0.0, %v1607
        %v1609 = vrot.slane %v1600, 4
        %v1610 = vsel %vm1147, 0.0, %v1609
        %v1611 = vrot.slane %v1604, 4
        %v1612 = vsel %vm1147, 0.0, %v1611
        %v1613 = vsel %vm1147, %v1555, %v1536
        %v1615 = vunpack.c.l.s4 1983009808
        %v1616 = vunpack.c.0.s8 %v1615
        %v1617 = vperm.slane %v1613, %v1616
        %v1618 = vrot.slane %v1556, 4
        %v1619 = vsel %vm1147, %v1618, %v1554
        %v1621 = vunpack.c.l.s4 1983009808
        %v1622 = vunpack.c.0.s8 %v1621
        %v1623 = vperm.slane %v1619, %v1622
        %v1624 = vsel %vm1147, %v1559, %v1548
        %v1626 = vunpack.c.l.s4 1983009808
        %v1627 = vunpack.c.0.s8 %v1626
        %v1628 = vperm.slane %v1624, %v1627
        %v1629 = vrot.slane %v1560, 4
        %v1630 = vsel %vm1147, %v1629, %v1558
        %v1632 = vunpack.c.l.s4 1983009808
        %v1633 = vunpack.c.0.s8 %v1632
        %v1634 = vperm.slane %v1630, %v1633
        %v1635 = vrot.slane %v1623, 4
        %v1636 = vsel %vm1147, %v1635, %v1617
        %v1638 = vunpack.c.l.s4 1934713408
        %v1639 = vunpack.c.0.s8 %v1638
        %v1640 = vperm.slane %v1636, %v1639
        %v1641 = vrot.slane %v1634, 4
        %v1642 = vsel %vm1147, %v1641, %v1628
        %v1644 = vunpack.c.l.s4 1934713408
        %v1645 = vunpack.c.0.s8 %v1644
        %v1646 = vperm.slane %v1642, %v1645
        %v1647 = vrot.slane %v1646, 4
        %v1648 = vsel %vm1147, %v1647, %v1640
        %v1649 = vrot.slane %v1640, 4
        %v1650 = vsel %vm1147, %v1646, %v1649
        %v1651 = vsel %vm1147, %v1607, %v1588
        %v1653 = vunpack.c.l.s4 1983009808
        %v1654 = vunpack.c.0.s8 %v1653
        %v1655 = vperm.slane %v1651, %v1654
        %v1656 = vrot.slane %v1608, 4
        %v1657 = vsel %vm1147, %v1656, %v1606
        %v1659 = vunpack.c.l.s4 1983009808
        %v1660 = vunpack.c.0.s8 %v1659
        %v1661 = vperm.slane %v1657, %v1660
        %v1662 = vsel %vm1147, %v1611, %v1600
        %v1664 = vunpack.c.l.s4 1983009808
        %v1665 = vunpack.c.0.s8 %v1664
        %v1666 = vperm.slane %v1662, %v1665
        %v1667 = vrot.slane %v1612, 4
        %v1668 = vsel %vm1147, %v1667, %v1610
        %v1670 = vunpack.c.l.s4 1983009808
        %v1671 = vunpack.c.0.s8 %v1670
        %v1672 = vperm.slane %v1668, %v1671
        %v1673 = vrot.slane %v1661, 4
        %v1674 = vsel %vm1147, %v1673, %v1655
        %v1676 = vunpack.c.l.s4 1934713408
        %v1677 = vunpack.c.0.s8 %v1676
        %v1678 = vperm.slane %v1674, %v1677
        %v1679 = vrot.slane %v1672, 4
        %v1680 = vsel %vm1147, %v1679, %v1666
        %v1682 = vunpack.c.l.s4 1934713408
        %v1683 = vunpack.c.0.s8 %v1682
        %v1684 = vperm.slane %v1680, %v1683
        %v1685 = vrot.slane %v1684, 4
        %v1686 = vsel %vm1147, %v1685, %v1678
        %v1687 = vrot.slane %v1678, 4
        %v1688 = vsel %vm1147, %v1684, %v1687
        %1691 = vrot.lane.b32.xlu0 %v1650, 16
        %v1692 = vpop.permute.xlu0 %1691
        %1693 = vrot.lane.b32.xlu0 %v1688, 16
        %v1694 = vpop.permute.xlu0 %1693
        %v1697 = vsel %vm1349, %v1648, %v1692
        %v1698 = vsel %vm1349, %v1686, %v1694
        %v1699 = vpack.c.bf16 %v1698, %v1697
        %v1700 = vld [vmem:[#allocation9] sm:$0xf]
        %v1701 = vld [vmem:[#allocation9 + $0x4] sm:$0xf]
        %v1702 = vld [vmem:[#allocation9 + $0x8] sm:$0xf]
        %v1703 = vld [vmem:[#allocation9 + $0xc] sm:$0xf]
        %v1708 = vunpack.c.l.b16 %v1700
        %v1709 = vunpack.c.l.b16 %v1701
        %v1710 = vunpack.c.l.b16 %v1702
        %v1711 = vunpack.c.l.b16 %v1703
        %v1712 = vpack.c.b16 %v1709, %v1708
        %v1713 = vpack.c.b16 %v1711, %v1710
        %v1717 = vsel %vm1118, %v1699, 0
        %1719 = vmatpush.bf16.msra.mxu0 0
        %1720 = vmatpush.bf16.msra.mxu0 0
        %1721 = vmatpush.bf16.msra.mxu0 0
        %1722 = vmatpush.bf16.msra.mxu0 0
        %1723 = vmatpush.bf16.msra.mxu0 0
        %1724 = vmatpush.bf16.msra.mxu0 0
        %1725 = vmatpush.bf16.msra.mxu0 %v1713
        %1726 = vmatpush.bf16.msra.mxu0 %v1712
        %1727 = vmatmul.bf16.gmra.mxu0 %v1717
        %v1728 = vpop.f32.mrf.mxu0
        %v1729 = vadd.f32 0.0, %v1728
        %v1730 = vpop.f32.mrf.mxu0
        %v1731 = vadd.f32 0.0, %v1730
        %1732 = vdwg.mxu0
        %v1733 = vunpack.c.l.bf16 %v626
        %v1734 = vunpack.c.l.bf16 %v627
        %v1735 = vadd.f32 %v1733, %v1729
        %v1736 = vadd.f32 %v1734, %v1731
        %v1737 = vsel %vm1118, %v1735, 0.0
        %1738 = vadd.xlane.f32.xlu0 %v1737
        %v1739 = vpop.xlane.xlu0 %1738
        %v1740 = vsel %vm1118, %v1736, 0.0
        %1741 = vadd.xlane.f32.xlu0 %v1740
        %v1742 = vpop.xlane.xlu0 %1741
        %v1743 = vrcp.pop 32.0
        %v1744 = vmul.f32 32.0, %v1743
        %v1745 = vsub.f32 1.0, %v1744
        %v1746 = vmul.f32 %v1743, %v1745
        %v1747 = vadd.f32 %v1743, %v1746
        %vm1748 = vweird.f32 %v1743
        %v1749 = vsel %vm1748, %v1743, %v1747
        %v1750 = vmul.f32 %v1739, %v1749
        %v1751 = vmul.f32 %v1742, %v1749
        %v1752 = vsub.f32 %v1735, %v1750
        %v1753 = vsub.f32 %v1736, %v1751
        %v1754 = vmul.f32 %v1752, %v1752
        %v1755 = vmul.f32 %v1753, %v1753
        %v1756 = vsel %vm1118, %v1754, 0.0
        %1757 = vadd.xlane.f32.xlu0 %v1756
        %v1758 = vpop.xlane.xlu0 %1757
        %v1759 = vsel %vm1118, %v1755, 0.0
        %1760 = vadd.xlane.f32.xlu0 %v1759
        %v1761 = vpop.xlane.xlu0 %1760
        %v1762 = vmul.f32 %v1758, %v1749
        %v1763 = vmul.f32 %v1761, %v1749
        %v1764 = vadd.f32 %v1762, 1e-05
        %v1765 = vadd.f32 %v1763, 1e-05
        %v1766 = vrsqrt.pop %v1764
        %v1767 = vmul.f32 %v1766, %v1764
        %v1768 = vmul.f32 %v1767, %v1766
        %v1769 = vmul.f32 0.5, %v1768
        %v1770 = vsub.f32 1.5, %v1769
        %v1771 = vmul.f32 %v1766, %v1770
        %vm1772 = vweird.f32 %v1764
        %vm1773 = vweird.f32 %v1766
        %vm1774 = vmor %vm1772, %vm1773
        %v1775 = vsel %vm1774, %v1766, %v1771
        %v1776 = vrsqrt.pop %v1765
        %v1777 = vmul.f32 %v1776, %v1765
        %v1778 = vmul.f32 %v1777, %v1776
        %v1779 = vmul.f32 0.5, %v1778
        %v1780 = vsub.f32 1.5, %v1779
        %v1781 = vmul.f32 %v1776, %v1780
        %vm1782 = vweird.f32 %v1765
        %vm1783 = vweird.f32 %v1776
        %vm1784 = vmor %vm1782, %vm1783
        %v1785 = vsel %vm1784, %v1776, %v1781
        %v1786 = vmul.f32 %v1752, %v1775
        %v1787 = vmul.f32 %v1753, %v1785
        %v1788 = vld [vmem:[%s10] sm:$0x1]
        %v1790 = vperm.slane %v1788, 0
        %v1792 = vmul.f32 %v1786, %v1790
        %v1793 = vmul.f32 %v1787, %v1790
        %v1794 = vld [vmem:[%s11] sm:$0x1]
        %v1796 = vperm.slane %v1794, 0
        %v1798 = vadd.f32 %v1792, %v1796
        %v1799 = vadd.f32 %v1793, %v1796
        %v1800 = vpack.c.bf16 %v1799, %v1798
        %v1801 = vld [vmem:[#allocation10] sm:$0xf]
        %v1802 = vld [vmem:[#allocation10 + $0x4] sm:$0xf]
        %v1803 = vld [vmem:[#allocation10 + $0x8] sm:$0xf]
        %v1804 = vld [vmem:[#allocation10 + $0xc] sm:$0xf]
        %v1805 = vld [vmem:[%s7] sm:$0x1]
        %v1807 = vperm.slane %v1805, 0
        %v1813 = vunpack.c.l.b16 %v1801
        %v1814 = vunpack.c.l.b16 %v1802
        %v1815 = vunpack.c.l.b16 %v1803
        %v1816 = vunpack.c.l.b16 %v1804
        %v1817 = vpack.c.b16 %v1814, %v1813
        %v1818 = vpack.c.b16 %v1816, %v1815
        %v1822 = vsel %vm1118, %v1800, 0
        %1824 = vmatpush.bf16.msra.mxu0 0
        %1825 = vmatpush.bf16.msra.mxu0 0
        %1826 = vmatpush.bf16.msra.mxu0 0
        %1827 = vmatpush.bf16.msra.mxu0 0
        %1828 = vmatpush.bf16.msra.mxu0 0
        %1829 = vmatpush.bf16.msra.mxu0 0
        %1830 = vmatpush.bf16.msra.mxu0 %v1818
        %1831 = vmatpush.bf16.msra.mxu0 %v1817
        %1832 = vmatmul.bf16.gmra.mxu0 %v1822
        %v1833 = vpop.f32.mrf.mxu0
        %v1834 = vadd.f32 %v1807, %v1833
        %v1835 = vpop.f32.mrf.mxu0
        %v1836 = vadd.f32 %v1807, %v1835
        %1837 = vdwg.mxu0
        %v1838 = vmax.f32 %v1834, 0.0
        %v1839 = vmax.f32 %v1836, 0.0
        %v1840 = vpack.c.bf16 %v1839, %v1838
        %v1841 = vld [vmem:[%s8] sm:$0xf]
        %v1842 = vld [vmem:[%s8 + $0x4] sm:$0xf]
        %v1843 = vld [vmem:[%s8 + $0x8] sm:$0xf]
        %v1844 = vld [vmem:[%s8 + $0xc] sm:$0xf]
        %v1845 = vld [vmem:[%s8 + $0x10] sm:$0xf]
        %v1846 = vld [vmem:[%s8 + $0x14] sm:$0xf]
        %v1847 = vld [vmem:[%s8 + $0x18] sm:$0xf]
        %v1848 = vld [vmem:[%s8 + $0x1c] sm:$0xf]
        %v1849 = vld [vmem:[%s9] sm:$0x1]
        %v1851 = vperm.slane %v1849, 0
        %v1861 = vunpack.c.l.b16 %v1841
        %v1862 = vunpack.c.l.b16 %v1842
        %v1863 = vunpack.c.l.b16 %v1843
        %v1864 = vunpack.c.l.b16 %v1844
        %v1865 = vunpack.c.l.b16 %v1845
        %v1866 = vunpack.c.l.b16 %v1846
        %v1867 = vunpack.c.l.b16 %v1847
        %v1868 = vunpack.c.l.b16 %v1848
        %v1869 = vpack.c.b16 %v1862, %v1861
        %v1870 = vpack.c.b16 %v1864, %v1863
        %v1871 = vpack.c.b16 %v1866, %v1865
        %v1872 = vpack.c.b16 %v1868, %v1867
        %vm1877 = vcmask 523264
        %v1879 = vsel %vm1877, %v1840, 0
        %1881 = vmatpush.bf16.msra.mxu0 0
        %1882 = vmatpush.bf16.msra.mxu0 0
        %1883 = vmatpush.bf16.msra.mxu0 0
        %1884 = vmatpush.bf16.msra.mxu0 0
        %1885 = vmatpush.bf16.msra.mxu0 %v1872
        %1886 = vmatpush.bf16.msra.mxu0 %v1871
        %1887 = vmatpush.bf16.msra.mxu0 %v1870
        %1888 = vmatpush.bf16.msra.mxu0 %v1869
        %1889 = vmatmul.bf16.gmra.mxu0 %v1879
        %v1890 = vpop.f32.mrf.mxu0
        %v1891 = vadd.f32 %v1851, %v1890
        %v1892 = vpop.f32.mrf.mxu0
        %v1893 = vadd.f32 %v1851, %v1892
        %1894 = vdwg.mxu0
        %v1895 = vadd.f32 %v1798, %v1891
        %v1896 = vadd.f32 %v1799, %v1893
        %v1897 = vsel %vm1118, %v1895, 0.0
        %1898 = vadd.xlane.f32.xlu0 %v1897
        %v1899 = vpop.xlane.xlu0 %1898
        %v1900 = vsel %vm1118, %v1896, 0.0
        %1901 = vadd.xlane.f32.xlu0 %v1900
        %v1902 = vpop.xlane.xlu0 %1901
        %v1903 = vmul.f32 %v1899, %v1749
        %v1904 = vmul.f32 %v1902, %v1749
        %v1905 = vsub.f32 %v1895, %v1903
        %v1906 = vsub.f32 %v1896, %v1904
        %v1907 = vmul.f32 %v1905, %v1905
        %v1908 = vmul.f32 %v1906, %v1906
        %v1909 = vsel %vm1118, %v1907, 0.0
        %1910 = vadd.xlane.f32.xlu0 %v1909
        %v1911 = vpop.xlane.xlu0 %1910
        %v1912 = vsel %vm1118, %v1908, 0.0
        %1913 = vadd.xlane.f32.xlu0 %v1912
        %v1914 = vpop.xlane.xlu0 %1913
        %v1915 = vmul.f32 %v1911, %v1749
        %v1916 = vmul.f32 %v1914, %v1749
        %v1917 = vadd.f32 %v1915, 1e-05
        %v1918 = vadd.f32 %v1916, 1e-05
        %v1919 = vrsqrt.pop %v1917
        %v1920 = vmul.f32 %v1919, %v1917
        %v1921 = vmul.f32 %v1920, %v1919
        %v1922 = vmul.f32 0.5, %v1921
        %v1923 = vsub.f32 1.5, %v1922
        %v1924 = vmul.f32 %v1919, %v1923
        %vm1925 = vweird.f32 %v1917
        %vm1926 = vweird.f32 %v1919
        %vm1927 = vmor %vm1925, %vm1926
        %v1928 = vsel %vm1927, %v1919, %v1924
        %v1929 = vrsqrt.pop %v1918
        %v1930 = vmul.f32 %v1929, %v1918
        %v1931 = vmul.f32 %v1930, %v1929
        %v1932 = vmul.f32 0.5, %v1931
        %v1933 = vsub.f32 1.5, %v1932
        %v1934 = vmul.f32 %v1929, %v1933
        %vm1935 = vweird.f32 %v1918
        %vm1936 = vweird.f32 %v1929
        %vm1937 = vmor %vm1935, %vm1936
        %v1938 = vsel %vm1937, %v1929, %v1934
        %v1939 = vmul.f32 %v1905, %v1928
        %v1940 = vmul.f32 %v1906, %v1938
        %v1941 = vld [vmem:[%s12] sm:$0x1]
        %v1943 = vperm.slane %v1941, 0
        %v1945 = vmul.f32 %v1939, %v1943
        %v1946 = vmul.f32 %v1940, %v1943
        %v1947 = vld [vmem:[%s13] sm:$0x1]
        %v1949 = vperm.slane %v1947, 0
        %v1951 = vadd.f32 %v1945, %v1949
        %v1952 = vadd.f32 %v1946, %v1949
        %1953 = vst.msk [vmem:[%s600] sm:$0xff] %vm1118, %v1951
        %1954 = vst.msk [vmem:[%s600 + $0x8] sm:$0xff] %vm1118, %v1952
        %s1955 = sand.u32 %s364, 1
        %s1956 = scalar_lea.sflag [#allocation6], %s1955
        %s1957 = sand.u32 %s364, 1
        %s1958 = smul.addr %s1957, 16
        %s1959 = scalar_lea.vmem [#allocation12], %s1958
        %s1960 = sand.u32 %s392, 1
        %s1961 = scalar_lea.sflag [#allocation14], %s1960
        %s1962 = sand.u32 %s392, 1
        %s1963 = smul.addr %s1962, 16
        %s1964 = scalar_lea.vmem [#allocation13], %s1963
        // Predicated region
        $region97: #{tpu_custom_call.1} parent=75 // pred_check
          %p1965 = pneg %p374
        $region98: #{tpu_custom_call.1} parent=75 // pred_check_branch
          %1967 = sbr.rel (%p1965) target = $region100
        $region99: #{tpu_custom_call.1} parent=75 // pred_region
          %s1968 = smul.u32 2, %s41
          %1970 = vsyncadd %s1956, 0
          %s1971 = smul.addr %s40, 2
          %s1972 = sadd.s32 %s1968, %s1971
          %s1973 = smul.addr %s1972, 8
          %s1974 = scalar_lea.hbm %s14, %s1973
          %s1975 = sshll.u32 %s1959, 4
          %s1976 = int_to_ptr.vmem [resolvable:$true] %s1975
          %s1977 = sshll.u32 %s1974, 4
          %s1978 = int_to_ptr.hbm [resolvable:$true] %s1977
          %1983 = dma.vmem_to_hbm [thread:$0]  %s1976, 256, %s1978, %s1956, 128, 128, 8
        $region100: #{tpu_custom_call.1} parent=75 // pred_fallthru
          _
        // Predicated region
        $region101: #{tpu_custom_call.1} parent=75 // pred_check
          %p1984 = pneg %p402
        $region102: #{tpu_custom_call.1} parent=75 // pred_check_branch
          %1986 = sbr.rel (%p1984) target = $region104
        $region103: #{tpu_custom_call.1} parent=75 // pred_region
          %s1987 = smul.u32 2, %s41
          %1989 = vsyncadd %s1961, 0
          %s1990 = smul.addr %s40, 4
          %s1991 = sadd.s32 %s1987, %s1990
          %s1992 = smul.addr %s1991, 4
          %s1993 = scalar_lea.hbm %s15, %s1992
          %s1994 = sshll.u32 %s1964, 4
          %s1995 = int_to_ptr.vmem [resolvable:$true] %s1994
          %s1996 = sshll.u32 %s1993, 4
          %s1997 = int_to_ptr.hbm [resolvable:$true] %s1996
          %2002 = dma.vmem_to_hbm [thread:$0]  %s1995, 256, %s1997, %s1961, 64, 64, 4
        $region104: #{tpu_custom_call.1} parent=75 // pred_fallthru
          _
      $region76: #{tpu_custom_call.1} parent=5 // pred_fallthru
        _
      %p2003 = scmp.le.s32.totalorder 2, %s31
      // Predicated region
      $region105: #{tpu_custom_call.1} parent=5 // pred_check
        %p2004 = pneg %p2003
      $region106: #{tpu_custom_call.1} parent=5 // pred_check_branch
        %2006 = sbr.rel (%p2004) target = $region108
      $region107: #{tpu_custom_call.1} parent=5 // pred_region
        %s2007 = ssub.s32 %s31, 2
        // Predicated region
        $region109: #{tpu_custom_call.1} parent=107 // pred_check
          %p2008 = pneg %p380
        $region110: #{tpu_custom_call.1} parent=107 // pred_check_branch
          %2010 = sbr.rel (%p2008) target = $region112
        $region111: #{tpu_custom_call.1} parent=107 // pred_region
          %s2011 = sand.u32 %s365, 1
          %s2012 = scalar_lea.sflag [#allocation6], %s2011
          %s2013 = sand.u32 %s365, 1
          %s2014 = smul.addr %s2013, 16
          %s2015 = scalar_lea.vmem [#allocation12], %s2014
          %2017 = dma.done %s2012, 256
        $region112: #{tpu_custom_call.1} parent=107 // pred_fallthru
          _
        // Predicated region
        $region113: #{tpu_custom_call.1} parent=107 // pred_check
          %p2018 = pneg %p408
        $region114: #{tpu_custom_call.1} parent=107 // pred_check_branch
          %2020 = sbr.rel (%p2018) target = $region116
        $region115: #{tpu_custom_call.1} parent=107 // pred_region
          %s2021 = sand.u32 %s393, 1
          %s2022 = scalar_lea.sflag [#allocation14], %s2021
          %s2023 = sand.u32 %s393, 1
          %s2024 = smul.addr %s2023, 16
          %s2025 = scalar_lea.vmem [#allocation13], %s2024
          %2027 = dma.done %s2022, 256
        $region116: #{tpu_custom_call.1} parent=107 // pred_fallthru
          _
      $region108: #{tpu_custom_call.1} parent=5 // pred_fallthru
        _
    $region6: #{tpu_custom_call.1} parent=1 // loop_footer
      %s35 = sadd.s32 1, %s31
    $region7: #{tpu_custom_call.1} parent=1 // loop_footer_branch
      %30 = sbr.rel target = $region3
    $region8: #{tpu_custom_call.1} parent=1 // loop_exit
      _
    %2028 = vsyncpa [#allocation5], 1
    %s2029 = scalar_lea.sflag [#allocation5], 1
    %2030 = vsyncpa %s2029, 1
    %2031 = vsyncpa [#allocation8], 1
    %2032 = vsyncpa [#allocation11], 1
    %2033 = vsyncpa [#allocation6], 1
    %s2034 = scalar_lea.sflag [#allocation6], 1
    %2035 = vsyncpa %s2034, 1
    %2036 = vsyncpa [#allocation14], 1
    %s2037 = scalar_lea.sflag [#allocation14], 1
    %2038 = vsyncpa %s2037, 1

</llo_original>
